<compile_context>
chip_gen: v7x
topology: tpu7x:2x2x1
jax: 0.10.0
libtpu: 0.0.40
codegen_flags: <defaults>
</compile_context>

<pallas_src>
import jax
import jax.numpy as jnp
from jax.experimental import pallas as pl
from jax.experimental.pallas import tpu as pltpu


def clip_classifier_kernel(txt_ref, img_ref, w1_ref, b1_ref, w2_ref, b2_ref, out_ref):
    """concat -> Linear(2D,H) -> ReLU -> Linear(H,C_pad), without a concat buffer."""
    d = txt_ref.shape[1]
    # Linear(1024 -> 512) as two accumulating K=512 passes against static Ref
    # slices of W1 (the fused [B,1024] tensor is never materialized).  Operands
    # already arrive in the weight dtype (bf16); MXU accumulates in f32.
    h = jnp.dot(txt_ref[...], w1_ref[pl.ds(0, d), :],
                preferred_element_type=jnp.float32)
    h = h + jnp.dot(img_ref[...], w1_ref[pl.ds(d, d), :],
                    preferred_element_type=jnp.float32)
    # Bias + ReLU in f32 (biases are prepared as f32; identical on v5e/v6e/v7x).
    h = jnp.maximum(h + b1_ref[...], 0.0)
    # Linear(512 -> C_pad); hidden is rounded to the weight dtype before the MXU
    # (matches the JAX reference; tiny rounding vs an all-f32 PyTorch run).
    logits = jnp.dot(h.astype(w2_ref.dtype), w2_ref[...],
                     preferred_element_type=jnp.float32)
    # Output is lane-dense (C padded to a multiple of 128) -> unmasked vst.
    out_ref[...] = (logits + b2_ref[...]).astype(out_ref.dtype)


def _nbytes(x):
    return x.size * x.dtype.itemsize


def prepare_classifier_params(w1, b1, w2, b2, *, weight_dtype=jnp.bfloat16):
    """One-time weight prep, hoisted out of the per-call forward.

    * weights stored [in, out] (transposed vs nn.Linear's [out, in]) in bf16
      (the W1 HBM->VMEM DMA dominates small-batch latency),
    * biases reshaped defensively to (1, N) and kept f32,
    * class dim lane-padded to a multiple of 128 (unmasked final store).
    """
    in_features, hidden = w1.shape
    num_classes = w2.shape[1]
    c_pad = max(128, pl.cdiv(num_classes, 128) * 128)

    w1 = jnp.asarray(w1).astype(weight_dtype)
    w2 = jnp.asarray(w2).astype(weight_dtype)
    b1 = jnp.asarray(b1, jnp.float32).reshape(1, hidden)
    b2 = jnp.asarray(b2, jnp.float32).reshape(1, num_classes)
    if c_pad != num_classes:
        w2 = jnp.pad(w2, ((0, 0), (0, c_pad - num_classes)))
        b2 = jnp.pad(b2, ((0, 0), (0, c_pad - num_classes)))
    # TODO(synk): on v7x, optionally requantize W1/W2 to fp8 (e4m3) with a scale
    # folded into b1 / a post-scale (halves the W1 DMA, doubles MXU rate);
    # gate on chip version since v5e/v6e MXUs do not take fp8.
    return dict(w1=w1, b1=b1, w2=w2, b2=b2,
                num_classes=num_classes, c_pad=c_pad,
                in_features=in_features, hidden=hidden)


def clip_classifier_forward(text_emb, image_emb, params, *, batch_tile=512):
    """concat -> Linear(1024,512) -> ReLU -> Linear(512,C); logits in f32."""
    w1, b1, w2, b2 = params["w1"], params["b1"], params["w2"], params["b2"]
    C, C_pad, H = params["num_classes"], params["c_pad"], params["hidden"]
    B, D = text_emb.shape
    assert params["in_features"] == 2 * D, "W1 must be [2*D, H] ([in, out] layout)"

    # Stream activations in the weight dtype (bf16): halves the dominant
    # per-tile HBM->VMEM DMA and removes per-tile f32->bf16 packs; accumulation
    # stays f32, so accuracy is unchanged vs the bf16-weight matmul.
    act_dtype = w1.dtype
    text_emb = text_emb.astype(act_dtype)
    image_emb = image_emb.astype(act_dtype)

    def cost(batch):
        flops = 2 * batch * (2 * D * H + H * C_pad)
        bytes_accessed = (2 * batch * D * act_dtype.dtype.itemsize
                          if hasattr(act_dtype, "dtype")
                          else 2 * batch * D * jnp.dtype(act_dtype).itemsize)
        bytes_accessed += (_nbytes(w1) + _nbytes(b1) + _nbytes(w2) + _nbytes(b2)
                           + batch * C_pad * 4)
        return pl.CostEstimate(flops=flops, transcendentals=0,
                               bytes_accessed=bytes_accessed)

    if B <= batch_tile:
        # Small batch / serving: single invocation, everything resident in VMEM,
        # no grid (nothing to pipeline or shard).  Entirely W1-DMA + call
        # overhead bound; the CostEstimate lets XLA overlap it with the
        # surrounding (frozen-CLIP) graph.
        # TODO(synk): hide the W1 HBM->VMEM load behind the CLIP backbone with a
        # cross-call DMA future (P10), or pin weights in VMEM if reused per step.
        vm = pl.BlockSpec(memory_space=pltpu.MemorySpace.VMEM)
        logits = pl.pallas_call(
            clip_classifier_kernel,
            out_shape=jax.ShapeDtypeStruct((B, C_pad), jnp.float32),
            in_specs=[vm] * 6,
            out_specs=vm,
            cost_estimate=cost(B),
        )(text_emb, image_emb, w1, b1, w2, b2)
        return logits[:, :C]

    # Tiled path (B > batch_tile => grid has >= 2 steps, so both v7x TCs work).
    # Large TB amortizes the ~0.35us fixed per-step overhead; bf16 activations
    # keep the double-buffered working set small (~4 MiB at TB=512), within even
    # v5e's 16 MiB default scoped VMEM, so no vmem_limit override is needed.
    n_steps = pl.cdiv(B, batch_tile)
    TB = ((pl.cdiv(B, n_steps) + 15) // 16) * 16     # bf16 sublane multiple
    Bp = n_steps * TB
    if Bp != B:
        text_emb = jnp.pad(text_emb, ((0, Bp - B), (0, 0)))
        image_emb = jnp.pad(image_emb, ((0, Bp - B), (0, 0)))

    def run(single_buffer_weights):
        # Weight/bias blocks are grid-invariant (constant index_map): fetched
        # once and kept resident; single-buffer them to save VMEM headroom.
        wkw = {"pipeline_mode": pl.Buffered(1)} if single_buffer_weights else {}
        in_specs = [
            pl.BlockSpec((TB, D), lambda i: (i, 0)),
            pl.BlockSpec((TB, D), lambda i: (i, 0)),
            pl.BlockSpec((2 * D, H), lambda i: (0, 0), **wkw),
            pl.BlockSpec((1, H), lambda i: (0, 0), **wkw),
            pl.BlockSpec((H, C_pad), lambda i: (0, 0), **wkw),
            pl.BlockSpec((1, C_pad), lambda i: (0, 0), **wkw),
        ]
        return pl.pallas_call(
            clip_classifier_kernel,
            out_shape=jax.ShapeDtypeStruct((Bp, C_pad), jnp.float32),
            grid=(Bp // TB,),
            in_specs=in_specs,
            out_specs=pl.BlockSpec((TB, C_pad), lambda i: (i, 0)),
            compiler_params=pltpu.CompilerParams(
                dimension_semantics=("parallel",)),
            cost_estimate=cost(Bp),
        )(text_emb, image_emb, w1, b1, w2, b2)

    try:
        logits = run(True)
    except Exception:
        # Fallback if this JAX build rejects single-buffered weight blocks.
        logits = run(False)
    return logits[:B, :C]


def reference_forward(text_emb, image_emb, params):
    """Plain-JAX reference with the same arithmetic (bf16 operands, f32 acc)."""
    w1, b1, w2, b2 = params["w1"], params["b1"], params["w2"], params["b2"]
    C = params["num_classes"]
    D = text_emb.shape[1]
    t = text_emb.astype(w1.dtype)
    i = image_emb.astype(w1.dtype)
    h = (jnp.dot(t, w1[:D], preferred_element_type=jnp.float32)
         + jnp.dot(i, w1[D:], preferred_element_type=jnp.float32))
    h = jnp.maximum(h + b1, 0.0)
    out = (jnp.dot(h.astype(w2.dtype), w2, preferred_element_type=jnp.float32) + b2)
    return out[:, :C]


if __name__ == "__main__":
    # Shapes consistent with the module: in_features = 1024 = 512 (text) + 512 (image).
    B = 8            # batch
    D = 512          # per-modality CLIP embedding dim
    HIDDEN = 512     # classifier hidden dim (nn.Linear(1024, 512))
    NUM_CLASSES = 10

    key = jax.random.PRNGKey(0)
    k_txt, k_img, k_w1, k_b1, k_w2, k_b2 = jax.random.split(key, 6)

    # CLIP outputs (stand-ins for clip_model(**inputs).text_embeds / .image_embeds).
    # TODO(synk): the frozen pretrained CLIP backbone itself is external and not
    # reimplemented here; its embeddings are the kernel inputs.
    text_emb = jax.random.normal(k_txt, (B, D), dtype=jnp.float32)
    image_emb = jax.random.normal(k_img, (B, D), dtype=jnp.float32)

    # Classifier parameters (PyTorch-style values); prep converts to [in,out]
    # bf16 weights, f32 (1,N) biases, lane-padded class dim — done ONCE.
    w1 = jax.random.normal(k_w1, (2 * D, HIDDEN), dtype=jnp.float32) * 0.02
    b1 = jax.random.normal(k_b1, (HIDDEN,), dtype=jnp.float32) * 0.02
    w2 = jax.random.normal(k_w2, (HIDDEN, NUM_CLASSES), dtype=jnp.float32) * 0.02
    b2 = jax.random.normal(k_b2, (NUM_CLASSES,), dtype=jnp.float32) * 0.02
    params = prepare_classifier_params(w1, b1, w2, b2)

    # Small-batch (grid-less, fully VMEM-resident) path.
    logits = jax.block_until_ready(
        clip_classifier_forward(text_emb, image_emb, params))
    ref = reference_forward(text_emb, image_emb, params)
    assert logits.shape == (B, NUM_CLASSES)
    assert jnp.allclose(logits, ref, atol=2e-2, rtol=2e-2), "small-batch mismatch"

    # Batch-tiled path (grid >= 2 steps, resident single-buffered weights,
    # bf16 streamed activations).
    B2 = 1024
    k_t2, k_i2 = jax.random.split(jax.random.PRNGKey(1), 2)
    text2 = jax.random.normal(k_t2, (B2, D), dtype=jnp.float32)
    image2 = jax.random.normal(k_i2, (B2, D), dtype=jnp.float32)
    logits2 = jax.block_until_ready(
        clip_classifier_forward(text2, image2, params, batch_tile=512))
    ref2 = reference_forward(text2, image2, params)
    assert logits2.shape == (B2, NUM_CLASSES)
    assert jnp.allclose(logits2, ref2, atol=2e-2, rtol=2e-2), "tiled-batch mismatch"

    print("KERNEL_OK")
</pallas_src>

<mosaic_0001>
module attributes {stable_mosaic.version = 11 : i64} {
  func.func @clip_classifier_kernel(%arg0: memref<8x512xbf16, #tpu.memory_space<vmem>>, %arg1: memref<8x512xbf16, #tpu.memory_space<vmem>>, %arg2: memref<1024x512xbf16, #tpu.memory_space<vmem>>, %arg3: memref<1x512xf32, #tpu.memory_space<vmem>>, %arg4: memref<512x128xbf16, #tpu.memory_space<vmem>>, %arg5: memref<1x128xf32, #tpu.memory_space<vmem>>, %arg6: memref<8x128xf32, #tpu.memory_space<vmem>>) attributes {dimension_semantics = [], scalar_prefetch = 0 : i64, scratch_operands = 0 : i64, tpu.core_type = #tpu.core_type<tc>} {
    %c0 = arith.constant 0 : index
    %c0_0 = arith.constant 0 : index
    %0 = vector.load %arg0[%c0, %c0_0] : memref<8x512xbf16, #tpu.memory_space<vmem>>, vector<8x512xbf16>
    %c0_1 = arith.constant 0 : index
    %c0_2 = arith.constant 0 : index
    %1 = vector.load %arg2[%c0_1, %c0_2] : memref<1024x512xbf16, #tpu.memory_space<vmem>>, vector<512x512xbf16>
    %cst = arith.constant dense<0.000000e+00> : vector<8x512xf32>
    %2 = tpu.matmul %0, %1, %cst {dimension_numbers = #tpu.dot_dimension_numbers<[1], [0], [0], [1], [0, 0, 1, 1], [], []>} : vector<8x512xbf16>, vector<512x512xbf16>, vector<8x512xf32> -> vector<8x512xf32>
    %c0_3 = arith.constant 0 : index
    %c0_4 = arith.constant 0 : index
    %3 = vector.load %arg1[%c0_3, %c0_4] : memref<8x512xbf16, #tpu.memory_space<vmem>>, vector<8x512xbf16>
    %c512 = arith.constant 512 : index
    %c0_5 = arith.constant 0 : index
    %4 = vector.load %arg2[%c512, %c0_5] : memref<1024x512xbf16, #tpu.memory_space<vmem>>, vector<512x512xbf16>
    %cst_6 = arith.constant dense<0.000000e+00> : vector<8x512xf32>
    %5 = tpu.matmul %3, %4, %cst_6 {dimension_numbers = #tpu.dot_dimension_numbers<[1], [0], [0], [1], [0, 0, 1, 1], [], []>} : vector<8x512xbf16>, vector<512x512xbf16>, vector<8x512xf32> -> vector<8x512xf32>
    %6 = arith.addf %2, %5 : vector<8x512xf32>
    %c0_7 = arith.constant 0 : index
    %c0_8 = arith.constant 0 : index
    %7 = vector.load %arg3[%c0_7, %c0_8] : memref<1x512xf32, #tpu.memory_space<vmem>>, vector<1x512xf32>
    %8 = vector.broadcast %7 : vector<1x512xf32> to vector<8x512xf32>
    %9 = arith.addf %6, %8 : vector<8x512xf32>
    %cst_9 = arith.constant 0.000000e+00 : f32
    %10 = vector.broadcast %cst_9 : f32 to vector<8x512xf32>
    %11 = arith.maximumf %9, %10 : vector<8x512xf32>
    %12 = arith.truncf %11 : vector<8x512xf32> to vector<8x512xbf16>
    %c0_10 = arith.constant 0 : index
    %c0_11 = arith.constant 0 : index
    %13 = vector.load %arg4[%c0_10, %c0_11] : memref<512x128xbf16, #tpu.memory_space<vmem>>, vector<512x128xbf16>
    %cst_12 = arith.constant dense<0.000000e+00> : vector<8x128xf32>
    %14 = tpu.matmul %12, %13, %cst_12 {dimension_numbers = #tpu.dot_dimension_numbers<[1], [0], [0], [1], [0, 0, 1, 1], [], []>} : vector<8x512xbf16>, vector<512x128xbf16>, vector<8x128xf32> -> vector<8x128xf32>
    %c0_13 = arith.constant 0 : index
    %c0_14 = arith.constant 0 : index
    %15 = vector.load %arg5[%c0_13, %c0_14] : memref<1x128xf32, #tpu.memory_space<vmem>>, vector<1x128xf32>
    %16 = vector.broadcast %15 : vector<1x128xf32> to vector<8x128xf32>
    %17 = arith.addf %14, %16 : vector<8x128xf32>
    %c0_15 = arith.constant 0 : index
    %c0_16 = arith.constant 0 : index
    %18 = vector.load %arg6[%c0_15, %c0_16] : memref<8x128xf32, #tpu.memory_space<vmem>>, vector<8x128xf32>
    tpu.vector_store %arg6[%c0_15, %c0_16], %17 {strides = array<i32>} : memref<8x128xf32, #tpu.memory_space<vmem>>, vector<8x128xf32>,
    return
  }
}

</mosaic_0001>

<llo_original>
// kernel: tpu_custom_call.1
$region0: #{tpu_custom_call.1}
  #allocation0 [shape = 'u32[]', space=smem, size = 0x4, offset = 0x4, fixed_abs, tag = 'smem constant byte address 0x4 - core index']
  #allocation1 [shape = 'u32[144,128]{1,0:T(1,128)}', space=vmem, size = 0x12000, scoped, tag = 'internal scratch']
  %s0 = inlined_call_operand.hbm [shape: bf16[8,512], index: 0, kind: input, shape index: {}]
  %s1 = inlined_call_operand.hbm [shape: bf16[8,512], index: 1, kind: input, shape index: {}]
  %s2 = inlined_call_operand.hbm [shape: bf16[1024,512], index: 2, kind: input, shape index: {}]
  %s3 = inlined_call_operand.vmem [shape: f32[1,512], index: 3, kind: input, shape index: {}]
  %s4 = inlined_call_operand.hbm [shape: bf16[512,128], index: 4, kind: input, shape index: {}]
  %s5 = inlined_call_operand.vmem [shape: f32[1,128], index: 5, kind: input, shape index: {}]
  %s6 = inlined_call_operand.hbm [shape: f32[8,128], index: 6, kind: output, shape index: {}]
  %s7 = sld [smem:[#allocation0]]
  $region50: #{tpu_custom_call.1} parent=0
    _
  %s9 = ssub.s32 1, %s7
  %s10 = scalar_select 0, %s9, %s7
  $region1: #{tpu_custom_call.1} parent=0
    #allocation2 [shape = 'u8[8192]{0}', space=vmem, size = 0x2000, scoped, tag = 'input window, operand 0, single buffered']
    #allocation3 [shape = 's32[1]{0}', space=sflag, size = 0x4, scoped, tag = 'scoped memory for tpu_custom_call.1']
    #allocation4 [shape = 's32[1]{0}', space=sflag, size = 0x4, scoped, tag = 'scoped memory for tpu_custom_call.1']
    #allocation5 [shape = 'u8[8192]{0}', space=vmem, size = 0x2000, scoped, tag = 'input window, operand 1, single buffered']
    #allocation6 [shape = 's32[1]{0}', space=sflag, size = 0x4, scoped, tag = 'scoped memory for tpu_custom_call.1']
    #allocation7 [shape = 'u8[1048576]{0}', space=vmem, size = 0x100000, scoped, tag = 'input window, operand 2, single buffered']
    #allocation8 [shape = 'u8[131072]{0}', space=vmem, size = 0x20000, scoped, tag = 'input window, operand 4, single buffered']
    #allocation9 [shape = 's32[1]{0}', space=sflag, size = 0x4, scoped, tag = 'scoped memory for tpu_custom_call.1']
    #allocation10 [shape = 'u8[4096]{0}', space=vmem, size = 0x1000, scoped, tag = 'output window, operand 0, single buffered']
    %11 = vsyncpa [#allocation3], 0
    %12 = vsyncpa [#allocation6], 0
    %13 = vsyncpa [#allocation9], 0
    %14 = vsyncpa [#allocation4], 0
    // Predicated region
    $region2: #{tpu_custom_call.1} parent=1 // pred_check
      _
    $region3: #{tpu_custom_call.1} parent=1 // pred_check_branch
      %16 = sbr.rel (0) target = $region5
    $region4: #{tpu_custom_call.1} parent=1 // pred_region
      %s18 = ssub.s32 256, 256
      %19 = vsyncadd [#allocation3], %s18
      %s21 = sshll.u32 [#allocation2], 4
      %s22 = int_to_ptr.vmem [resolvable:$true] %s21
      %24 = dma.hbm_to_vmem [thread:$0]  %s0, 256, %s22, [#allocation3]
    $region5: #{tpu_custom_call.1} parent=1 // pred_fallthru
      _
    // Predicated region
    $region6: #{tpu_custom_call.1} parent=1 // pred_check
      _
    $region7: #{tpu_custom_call.1} parent=1 // pred_check_branch
      %26 = sbr.rel (0) target = $region9
    $region8: #{tpu_custom_call.1} parent=1 // pred_region
      %s28 = ssub.s32 256, 256
      %29 = vsyncadd [#allocation6], %s28
      %s31 = sshll.u32 [#allocation5], 4
      %s32 = int_to_ptr.vmem [resolvable:$true] %s31
      %34 = dma.hbm_to_vmem [thread:$0]  %s1, 256, %s32, [#allocation6]
    $region9: #{tpu_custom_call.1} parent=1 // pred_fallthru
      _
    // Predicated region
    $region10: #{tpu_custom_call.1} parent=1 // pred_check
      _
    $region11: #{tpu_custom_call.1} parent=1 // pred_check_branch
      %36 = sbr.rel (0) target = $region13
    $region12: #{tpu_custom_call.1} parent=1 // pred_region
      %s38 = ssub.s32 32768, 32768
      %39 = vsyncadd [#allocation6], %s38
      %s40 = sshll.u32 [#allocation7], 4
      %s41 = int_to_ptr.vmem [resolvable:$true] %s40
      %46 = dma.hbm_to_vmem [thread:$0]  %s2, 32768, %s41, [#allocation6], 256, 256, 16
    $region13: #{tpu_custom_call.1} parent=1 // pred_fallthru
      _
    // Predicated region
    $region14: #{tpu_custom_call.1} parent=1 // pred_check
      _
    $region15: #{tpu_custom_call.1} parent=1 // pred_check_branch
      %48 = sbr.rel (0) target = $region17
    $region16: #{tpu_custom_call.1} parent=1 // pred_region
      _
    $region17: #{tpu_custom_call.1} parent=1 // pred_fallthru
      _
    // Predicated region
    $region18: #{tpu_custom_call.1} parent=1 // pred_check
      _
    $region19: #{tpu_custom_call.1} parent=1 // pred_check_branch
      %50 = sbr.rel (0) target = $region21
    $region20: #{tpu_custom_call.1} parent=1 // pred_region
      %s52 = ssub.s32 4096, 4096
      %53 = vsyncadd [#allocation9], %s52
      %s54 = sshll.u32 [#allocation8], 4
      %s55 = int_to_ptr.vmem [resolvable:$true] %s54
      %60 = dma.hbm_to_vmem [thread:$0]  %s4, 4096, %s55, [#allocation9], 64, 64, 4
    $region21: #{tpu_custom_call.1} parent=1 // pred_fallthru
      _
    // Predicated region
    $region22: #{tpu_custom_call.1} parent=1 // pred_check
      _
    $region23: #{tpu_custom_call.1} parent=1 // pred_check_branch
      %62 = sbr.rel (0) target = $region25
    $region24: #{tpu_custom_call.1} parent=1 // pred_region
      _
    $region25: #{tpu_custom_call.1} parent=1 // pred_fallthru
      _
    // Predicated region
    $region26: #{tpu_custom_call.1} parent=1 // pred_check
      _
    $region27: #{tpu_custom_call.1} parent=1 // pred_check_branch
      %64 = sbr.rel (0) target = $region29
    $region28: #{tpu_custom_call.1} parent=1 // pred_region
      %65 = dma.done [#allocation3], 256
    $region29: #{tpu_custom_call.1} parent=1 // pred_fallthru
      _
    // Predicated region
    $region30: #{tpu_custom_call.1} parent=1 // pred_check
      _
    $region31: #{tpu_custom_call.1} parent=1 // pred_check_branch
      %67 = sbr.rel (0) target = $region33
    $region32: #{tpu_custom_call.1} parent=1 // pred_region
      %68 = dma.done [#allocation6], 256
    $region33: #{tpu_custom_call.1} parent=1 // pred_fallthru
      _
    // Predicated region
    $region34: #{tpu_custom_call.1} parent=1 // pred_check
      _
    $region35: #{tpu_custom_call.1} parent=1 // pred_check_branch
      %70 = sbr.rel (0) target = $region37
    $region36: #{tpu_custom_call.1} parent=1 // pred_region
      %71 = dma.done [#allocation6], 32768
    $region37: #{tpu_custom_call.1} parent=1 // pred_fallthru
      _
    // Predicated region
    $region38: #{tpu_custom_call.1} parent=1 // pred_check
      _
    $region39: #{tpu_custom_call.1} parent=1 // pred_check_branch
      %73 = sbr.rel (0) target = $region41
    $region40: #{tpu_custom_call.1} parent=1 // pred_region
      %74 = dma.done [#allocation9], 4096
    $region41: #{tpu_custom_call.1} parent=1 // pred_fallthru
      _
    %v76 = vld [vmem:[#allocation2] sm:$0xff]
    %v77 = vld [vmem:[#allocation2 + $0x8] sm:$0xff]
    %v78 = vld [vmem:[#allocation7] sm:$0xff]
    %v79 = vld [vmem:[#allocation7 + $0x8] sm:$0xff]
    %v80 = vld [vmem:[#allocation7 + $0x10] sm:$0xff]
    %v81 = vld [vmem:[#allocation7 + $0x18] sm:$0xff]
    %v82 = vld [vmem:[#allocation7 + $0x20] sm:$0xff]
    %v83 = vld [vmem:[#allocation7 + $0x28] sm:$0xff]
    %v84 = vld [vmem:[#allocation7 + $0x30] sm:$0xff]
    %v85 = vld [vmem:[#allocation7 + $0x38] sm:$0xff]
    %v86 = vld [vmem:[#allocation7 + $0x40] sm:$0xff]
    %v87 = vld [vmem:[#allocation7 + $0x48] sm:$0xff]
    %v88 = vld [vmem:[#allocation7 + $0x50] sm:$0xff]
    %v89 = vld [vmem:[#allocation7 + $0x58] sm:$0xff]
    %v90 = vld [vmem:[#allocation7 + $0x60] sm:$0xff]
    %v91 = vld [vmem:[#allocation7 + $0x68] sm:$0xff]
    %v92 = vld [vmem:[#allocation7 + $0x70] sm:$0xff]
    %v93 = vld [vmem:[#allocation7 + $0x78] sm:$0xff]
    %v94 = vld [vmem:[#allocation7 + $0x80] sm:$0xff]
    %v95 = vld [vmem:[#allocation7 + $0x88] sm:$0xff]
    %v96 = vld [vmem:[#allocation7 + $0x90] sm:$0xff]
    %v97 = vld [vmem:[#allocation7 + $0x98] sm:$0xff]
    %v98 = vld [vmem:[#allocation7 + $0xa0] sm:$0xff]
    %v99 = vld [vmem:[#allocation7 + $0xa8] sm:$0xff]
    %v100 = vld [vmem:[#allocation7 + $0xb0] sm:$0xff]
    %v101 = vld [vmem:[#allocation7 + $0xb8] sm:$0xff]
    %v102 = vld [vmem:[#allocation7 + $0xc0] sm:$0xff]
    %v103 = vld [vmem:[#allocation7 + $0xc8] sm:$0xff]
    %v104 = vld [vmem:[#allocation7 + $0xd0] sm:$0xff]
    %v105 = vld [vmem:[#allocation7 + $0xd8] sm:$0xff]
    %v106 = vld [vmem:[#allocation7 + $0xe0] sm:$0xff]
    %v107 = vld [vmem:[#allocation7 + $0xe8] sm:$0xff]
    %v108 = vld [vmem:[#allocation7 + $0xf0] sm:$0xff]
    %v109 = vld [vmem:[#allocation7 + $0xf8] sm:$0xff]
    %v110 = vld [vmem:[#allocation7 + $0x100] sm:$0xff]
    %v111 = vld [vmem:[#allocation7 + $0x108] sm:$0xff]
    %v112 = vld [vmem:[#allocation7 + $0x110] sm:$0xff]
    %v113 = vld [vmem:[#allocation7 + $0x118] sm:$0xff]
    %v114 = vld [vmem:[#allocation7 + $0x120] sm:$0xff]
    %v115 = vld [vmem:[#allocation7 + $0x128] sm:$0xff]
    %v116 = vld [vmem:[#allocation7 + $0x130] sm:$0xff]
    %v117 = vld [vmem:[#allocation7 + $0x138] sm:$0xff]
    %v118 = vld [vmem:[#allocation7 + $0x140] sm:$0xff]
    %v119 = vld [vmem:[#allocation7 + $0x148] sm:$0xff]
    %v120 = vld [vmem:[#allocation7 + $0x150] sm:$0xff]
    %v121 = vld [vmem:[#allocation7 + $0x158] sm:$0xff]
    %v122 = vld [vmem:[#allocation7 + $0x160] sm:$0xff]
    %v123 = vld [vmem:[#allocation7 + $0x168] sm:$0xff]
    %v124 = vld [vmem:[#allocation7 + $0x170] sm:$0xff]
    %v125 = vld [vmem:[#allocation7 + $0x178] sm:$0xff]
    %v126 = vld [vmem:[#allocation7 + $0x180] sm:$0xff]
    %v127 = vld [vmem:[#allocation7 + $0x188] sm:$0xff]
    %v128 = vld [vmem:[#allocation7 + $0x190] sm:$0xff]
    %v129 = vld [vmem:[#allocation7 + $0x198] sm:$0xff]
    %v130 = vld [vmem:[#allocation7 + $0x1a0] sm:$0xff]
    %v131 = vld [vmem:[#allocation7 + $0x1a8] sm:$0xff]
    %v132 = vld [vmem:[#allocation7 + $0x1b0] sm:$0xff]
    %v133 = vld [vmem:[#allocation7 + $0x1b8] sm:$0xff]
    %v134 = vld [vmem:[#allocation7 + $0x1c0] sm:$0xff]
    %v135 = vld [vmem:[#allocation7 + $0x1c8] sm:$0xff]
    %v136 = vld [vmem:[#allocation7 + $0x1d0] sm:$0xff]
    %v137 = vld [vmem:[#allocation7 + $0x1d8] sm:$0xff]
    %v138 = vld [vmem:[#allocation7 + $0x1e0] sm:$0xff]
    %v139 = vld [vmem:[#allocation7 + $0x1e8] sm:$0xff]
    %v140 = vld [vmem:[#allocation7 + $0x1f0] sm:$0xff]
    %v141 = vld [vmem:[#allocation7 + $0x1f8] sm:$0xff]
    %v142 = vld [vmem:[#allocation7 + $0x200] sm:$0xff]
    %v143 = vld [vmem:[#allocation7 + $0x208] sm:$0xff]
    %v144 = vld [vmem:[#allocation7 + $0x210] sm:$0xff]
    %v145 = vld [vmem:[#allocation7 + $0x218] sm:$0xff]
    %v146 = vld [vmem:[#allocation7 + $0x220] sm:$0xff]
    %v147 = vld [vmem:[#allocation7 + $0x228] sm:$0xff]
    %v148 = vld [vmem:[#allocation7 + $0x230] sm:$0xff]
    %v149 = vld [vmem:[#allocation7 + $0x238] sm:$0xff]
    %v150 = vld [vmem:[#allocation7 + $0x240] sm:$0xff]
    %v151 = vld [vmem:[#allocation7 + $0x248] sm:$0xff]
    %v152 = vld [vmem:[#allocation7 + $0x250] sm:$0xff]
    %v153 = vld [vmem:[#allocation7 + $0x258] sm:$0xff]
    %v154 = vld [vmem:[#allocation7 + $0x260] sm:$0xff]
    %v155 = vld [vmem:[#allocation7 + $0x268] sm:$0xff]
    %v156 = vld [vmem:[#allocation7 + $0x270] sm:$0xff]
    %v157 = vld [vmem:[#allocation7 + $0x278] sm:$0xff]
    %v158 = vld [vmem:[#allocation7 + $0x280] sm:$0xff]
    %v159 = vld [vmem:[#allocation7 + $0x288] sm:$0xff]
    %v160 = vld [vmem:[#allocation7 + $0x290] sm:$0xff]
    %v161 = vld [vmem:[#allocation7 + $0x298] sm:$0xff]
    %v162 = vld [vmem:[#allocation7 + $0x2a0] sm:$0xff]
    %v163 = vld [vmem:[#allocation7 + $0x2a8] sm:$0xff]
    %v164 = vld [vmem:[#allocation7 + $0x2b0] sm:$0xff]
    %v165 = vld [vmem:[#allocation7 + $0x2b8] sm:$0xff]
    %v166 = vld [vmem:[#allocation7 + $0x2c0] sm:$0xff]
    %v167 = vld [vmem:[#allocation7 + $0x2c8] sm:$0xff]
    %v168 = vld [vmem:[#allocation7 + $0x2d0] sm:$0xff]
    %v169 = vld [vmem:[#allocation7 + $0x2d8] sm:$0xff]
    %v170 = vld [vmem:[#allocation7 + $0x2e0] sm:$0xff]
    %v171 = vld [vmem:[#allocation7 + $0x2e8] sm:$0xff]
    %v172 = vld [vmem:[#allocation7 + $0x2f0] sm:$0xff]
    %v173 = vld [vmem:[#allocation7 + $0x2f8] sm:$0xff]
    %v174 = vld [vmem:[#allocation7 + $0x300] sm:$0xff]
    %v175 = vld [vmem:[#allocation7 + $0x308] sm:$0xff]
    %v176 = vld [vmem:[#allocation7 + $0x310] sm:$0xff]
    %v177 = vld [vmem:[#allocation7 + $0x318] sm:$0xff]
    %v178 = vld [vmem:[#allocation7 + $0x320] sm:$0xff]
    %v179 = vld [vmem:[#allocation7 + $0x328] sm:$0xff]
    %v180 = vld [vmem:[#allocation7 + $0x330] sm:$0xff]
    %v181 = vld [vmem:[#allocation7 + $0x338] sm:$0xff]
    %v182 = vld [vmem:[#allocation7 + $0x340] sm:$0xff]
    %v183 = vld [vmem:[#allocation7 + $0x348] sm:$0xff]
    %v184 = vld [vmem:[#allocation7 + $0x350] sm:$0xff]
    %v185 = vld [vmem:[#allocation7 + $0x358] sm:$0xff]
    %v186 = vld [vmem:[#allocation7 + $0x360] sm:$0xff]
    %v187 = vld [vmem:[#allocation7 + $0x368] sm:$0xff]
    %v188 = vld [vmem:[#allocation7 + $0x370] sm:$0xff]
    %v189 = vld [vmem:[#allocation7 + $0x378] sm:$0xff]
    %v190 = vld [vmem:[#allocation7 + $0x380] sm:$0xff]
    %v191 = vld [vmem:[#allocation7 + $0x388] sm:$0xff]
    %v192 = vld [vmem:[#allocation7 + $0x390] sm:$0xff]
    %v193 = vld [vmem:[#allocation7 + $0x398] sm:$0xff]
    %v194 = vld [vmem:[#allocation7 + $0x3a0] sm:$0xff]
    %v195 = vld [vmem:[#allocation7 + $0x3a8] sm:$0xff]
    %v196 = vld [vmem:[#allocation7 + $0x3b0] sm:$0xff]
    %v197 = vld [vmem:[#allocation7 + $0x3b8] sm:$0xff]
    %v198 = vld [vmem:[#allocation7 + $0x3c0] sm:$0xff]
    %v199 = vld [vmem:[#allocation7 + $0x3c8] sm:$0xff]
    %v200 = vld [vmem:[#allocation7 + $0x3d0] sm:$0xff]
    %v201 = vld [vmem:[#allocation7 + $0x3d8] sm:$0xff]
    %v202 = vld [vmem:[#allocation7 + $0x3e0] sm:$0xff]
    %v203 = vld [vmem:[#allocation7 + $0x3e8] sm:$0xff]
    %v204 = vld [vmem:[#allocation7 + $0x3f0] sm:$0xff]
    %v205 = vld [vmem:[#allocation7 + $0x3f8] sm:$0xff]
    %v206 = vld [vmem:[#allocation5] sm:$0xff]
    %v207 = vld [vmem:[#allocation5 + $0x8] sm:$0xff]
    %v208 = vld [vmem:[#allocation7 + $0x400] sm:$0xff]
    %v209 = vld [vmem:[#allocation7 + $0x408] sm:$0xff]
    %v210 = vld [vmem:[#allocation7 + $0x410] sm:$0xff]
    %v211 = vld [vmem:[#allocation7 + $0x418] sm:$0xff]
    %v212 = vld [vmem:[#allocation7 + $0x420] sm:$0xff]
    %v213 = vld [vmem:[#allocation7 + $0x428] sm:$0xff]
    %v214 = vld [vmem:[#allocation7 + $0x430] sm:$0xff]
    %v215 = vld [vmem:[#allocation7 + $0x438] sm:$0xff]
    %v216 = vld [vmem:[#allocation7 + $0x440] sm:$0xff]
    %v217 = vld [vmem:[#allocation7 + $0x448] sm:$0xff]
    %v218 = vld [vmem:[#allocation7 + $0x450] sm:$0xff]
    %v219 = vld [vmem:[#allocation7 + $0x458] sm:$0xff]
    %v220 = vld [vmem:[#allocation7 + $0x460] sm:$0xff]
    %v221 = vld [vmem:[#allocation7 + $0x468] sm:$0xff]
    %v222 = vld [vmem:[#allocation7 + $0x470] sm:$0xff]
    %v223 = vld [vmem:[#allocation7 + $0x478] sm:$0xff]
    %v224 = vld [vmem:[#allocation7 + $0x480] sm:$0xff]
    %v225 = vld [vmem:[#allocation7 + $0x488] sm:$0xff]
    %v226 = vld [vmem:[#allocation7 + $0x490] sm:$0xff]
    %v227 = vld [vmem:[#allocation7 + $0x498] sm:$0xff]
    %v228 = vld [vmem:[#allocation7 + $0x4a0] sm:$0xff]
    %v229 = vld [vmem:[#allocation7 + $0x4a8] sm:$0xff]
    %v230 = vld [vmem:[#allocation7 + $0x4b0] sm:$0xff]
    %v231 = vld [vmem:[#allocation7 + $0x4b8] sm:$0xff]
    %v232 = vld [vmem:[#allocation7 + $0x4c0] sm:$0xff]
    %v233 = vld [vmem:[#allocation7 + $0x4c8] sm:$0xff]
    %v234 = vld [vmem:[#allocation7 + $0x4d0] sm:$0xff]
    %v235 = vld [vmem:[#allocation7 + $0x4d8] sm:$0xff]
    %v236 = vld [vmem:[#allocation7 + $0x4e0] sm:$0xff]
    %v237 = vld [vmem:[#allocation7 + $0x4e8] sm:$0xff]
    %v238 = vld [vmem:[#allocation7 + $0x4f0] sm:$0xff]
    %v239 = vld [vmem:[#allocation7 + $0x4f8] sm:$0xff]
    %v240 = vld [vmem:[#allocation7 + $0x500] sm:$0xff]
    %v241 = vld [vmem:[#allocation7 + $0x508] sm:$0xff]
    %v242 = vld [vmem:[#allocation7 + $0x510] sm:$0xff]
    %v243 = vld [vmem:[#allocation7 + $0x518] sm:$0xff]
    %v244 = vld [vmem:[#allocation7 + $0x520] sm:$0xff]
    %v245 = vld [vmem:[#allocation7 + $0x528] sm:$0xff]
    %v246 = vld [vmem:[#allocation7 + $0x530] sm:$0xff]
    %v247 = vld [vmem:[#allocation7 + $0x538] sm:$0xff]
    %v248 = vld [vmem:[#allocation7 + $0x540] sm:$0xff]
    %v249 = vld [vmem:[#allocation7 + $0x548] sm:$0xff]
    %v250 = vld [vmem:[#allocation7 + $0x550] sm:$0xff]
    %v251 = vld [vmem:[#allocation7 + $0x558] sm:$0xff]
    %v252 = vld [vmem:[#allocation7 + $0x560] sm:$0xff]
    %v253 = vld [vmem:[#allocation7 + $0x568] sm:$0xff]
    %v254 = vld [vmem:[#allocation7 + $0x570] sm:$0xff]
    %v255 = vld [vmem:[#allocation7 + $0x578] sm:$0xff]
    %v256 = vld [vmem:[#allocation7 + $0x580] sm:$0xff]
    %v257 = vld [vmem:[#allocation7 + $0x588] sm:$0xff]
    %v258 = vld [vmem:[#allocation7 + $0x590] sm:$0xff]
    %v259 = vld [vmem:[#allocation7 + $0x598] sm:$0xff]
    %v260 = vld [vmem:[#allocation7 + $0x5a0] sm:$0xff]
    %v261 = vld [vmem:[#allocation7 + $0x5a8] sm:$0xff]
    %v262 = vld [vmem:[#allocation7 + $0x5b0] sm:$0xff]
    %v263 = vld [vmem:[#allocation7 + $0x5b8] sm:$0xff]
    %v264 = vld [vmem:[#allocation7 + $0x5c0] sm:$0xff]
    %v265 = vld [vmem:[#allocation7 + $0x5c8] sm:$0xff]
    %v266 = vld [vmem:[#allocation7 + $0x5d0] sm:$0xff]
    %v267 = vld [vmem:[#allocation7 + $0x5d8] sm:$0xff]
    %v268 = vld [vmem:[#allocation7 + $0x5e0] sm:$0xff]
    %v269 = vld [vmem:[#allocation7 + $0x5e8] sm:$0xff]
    %v270 = vld [vmem:[#allocation7 + $0x5f0] sm:$0xff]
    %v271 = vld [vmem:[#allocation7 + $0x5f8] sm:$0xff]
    %v272 = vld [vmem:[#allocation7 + $0x600] sm:$0xff]
    %v273 = vld [vmem:[#allocation7 + $0x608] sm:$0xff]
    %v274 = vld [vmem:[#allocation7 + $0x610] sm:$0xff]
    %v275 = vld [vmem:[#allocation7 + $0x618] sm:$0xff]
    %v276 = vld [vmem:[#allocation7 + $0x620] sm:$0xff]
    %v277 = vld [vmem:[#allocation7 + $0x628] sm:$0xff]
    %v278 = vld [vmem:[#allocation7 + $0x630] sm:$0xff]
    %v279 = vld [vmem:[#allocation7 + $0x638] sm:$0xff]
    %v280 = vld [vmem:[#allocation7 + $0x640] sm:$0xff]
    %v281 = vld [vmem:[#allocation7 + $0x648] sm:$0xff]
    %v282 = vld [vmem:[#allocation7 + $0x650] sm:$0xff]
    %v283 = vld [vmem:[#allocation7 + $0x658] sm:$0xff]
    %v284 = vld [vmem:[#allocation7 + $0x660] sm:$0xff]
    %v285 = vld [vmem:[#allocation7 + $0x668] sm:$0xff]
    %v286 = vld [vmem:[#allocation7 + $0x670] sm:$0xff]
    %v287 = vld [vmem:[#allocation7 + $0x678] sm:$0xff]
    %v288 = vld [vmem:[#allocation7 + $0x680] sm:$0xff]
    %v289 = vld [vmem:[#allocation7 + $0x688] sm:$0xff]
    %v290 = vld [vmem:[#allocation7 + $0x690] sm:$0xff]
    %v291 = vld [vmem:[#allocation7 + $0x698] sm:$0xff]
    %v292 = vld [vmem:[#allocation7 + $0x6a0] sm:$0xff]
    %v293 = vld [vmem:[#allocation7 + $0x6a8] sm:$0xff]
    %v294 = vld [vmem:[#allocation7 + $0x6b0] sm:$0xff]
    %v295 = vld [vmem:[#allocation7 + $0x6b8] sm:$0xff]
    %v296 = vld [vmem:[#allocation7 + $0x6c0] sm:$0xff]
    %v297 = vld [vmem:[#allocation7 + $0x6c8] sm:$0xff]
    %v298 = vld [vmem:[#allocation7 + $0x6d0] sm:$0xff]
    %v299 = vld [vmem:[#allocation7 + $0x6d8] sm:$0xff]
    %v300 = vld [vmem:[#allocation7 + $0x6e0] sm:$0xff]
    %v301 = vld [vmem:[#allocation7 + $0x6e8] sm:$0xff]
    %v302 = vld [vmem:[#allocation7 + $0x6f0] sm:$0xff]
    %v303 = vld [vmem:[#allocation7 + $0x6f8] sm:$0xff]
    %v304 = vld [vmem:[#allocation7 + $0x700] sm:$0xff]
    %v305 = vld [vmem:[#allocation7 + $0x708] sm:$0xff]
    %v306 = vld [vmem:[#allocation7 + $0x710] sm:$0xff]
    %v307 = vld [vmem:[#allocation7 + $0x718] sm:$0xff]
    %v308 = vld [vmem:[#allocation7 + $0x720] sm:$0xff]
    %v309 = vld [vmem:[#allocation7 + $0x728] sm:$0xff]
    %v310 = vld [vmem:[#allocation7 + $0x730] sm:$0xff]
    %v311 = vld [vmem:[#allocation7 + $0x738] sm:$0xff]
    %v312 = vld [vmem:[#allocation7 + $0x740] sm:$0xff]
    %v313 = vld [vmem:[#allocation7 + $0x748] sm:$0xff]
    %v314 = vld [vmem:[#allocation7 + $0x750] sm:$0xff]
    %v315 = vld [vmem:[#allocation7 + $0x758] sm:$0xff]
    %v316 = vld [vmem:[#allocation7 + $0x760] sm:$0xff]
    %v317 = vld [vmem:[#allocation7 + $0x768] sm:$0xff]
    %v318 = vld [vmem:[#allocation7 + $0x770] sm:$0xff]
    %v319 = vld [vmem:[#allocation7 + $0x778] sm:$0xff]
    %v320 = vld [vmem:[#allocation7 + $0x780] sm:$0xff]
    %v321 = vld [vmem:[#allocation7 + $0x788] sm:$0xff]
    %v322 = vld [vmem:[#allocation7 + $0x790] sm:$0xff]
    %v323 = vld [vmem:[#allocation7 + $0x798] sm:$0xff]
    %v324 = vld [vmem:[#allocation7 + $0x7a0] sm:$0xff]
    %v325 = vld [vmem:[#allocation7 + $0x7a8] sm:$0xff]
    %v326 = vld [vmem:[#allocation7 + $0x7b0] sm:$0xff]
    %v327 = vld [vmem:[#allocation7 + $0x7b8] sm:$0xff]
    %v328 = vld [vmem:[#allocation7 + $0x7c0] sm:$0xff]
    %v329 = vld [vmem:[#allocation7 + $0x7c8] sm:$0xff]
    %v330 = vld [vmem:[#allocation7 + $0x7d0] sm:$0xff]
    %v331 = vld [vmem:[#allocation7 + $0x7d8] sm:$0xff]
    %v332 = vld [vmem:[#allocation7 + $0x7e0] sm:$0xff]
    %v333 = vld [vmem:[#allocation7 + $0x7e8] sm:$0xff]
    %v334 = vld [vmem:[#allocation7 + $0x7f0] sm:$0xff]
    %v335 = vld [vmem:[#allocation7 + $0x7f8] sm:$0xff]
    %v338 = vunpack.c.l.b16 %v206
    %v339 = vunpack.c.h.b16 %v206
    %v340 = vunpack.c.l.b16 %v207
    %v341 = vunpack.c.h.b16 %v207
    %v342 = vpack.c.b16 %v338, %v338
    %v343 = vpack.c.b16 %v339, %v339
    %v344 = vpack.c.b16 %v340, %v340
    %v345 = vpack.c.b16 %v341, %v341
    %v478 = vunpack.c.l.b16 %v208
    %v479 = vunpack.c.h.b16 %v208
    %v480 = vunpack.c.l.b16 %v209
    %v481 = vunpack.c.h.b16 %v209
    %v482 = vunpack.c.l.b16 %v210
    %v483 = vunpack.c.h.b16 %v210
    %v484 = vunpack.c.l.b16 %v211
    %v485 = vunpack.c.h.b16 %v211
    %v486 = vunpack.c.l.b16 %v212
    %v487 = vunpack.c.h.b16 %v212
    %v488 = vunpack.c.l.b16 %v213
    %v489 = vunpack.c.h.b16 %v213
    %v490 = vunpack.c.l.b16 %v214
    %v491 = vunpack.c.h.b16 %v214
    %v492 = vunpack.c.l.b16 %v215
    %v493 = vunpack.c.h.b16 %v215
    %v494 = vunpack.c.l.b16 %v216
    %v495 = vunpack.c.h.b16 %v216
    %v496 = vunpack.c.l.b16 %v217
    %v497 = vunpack.c.h.b16 %v217
    %v498 = vunpack.c.l.b16 %v218
    %v499 = vunpack.c.h.b16 %v218
    %v500 = vunpack.c.l.b16 %v219
    %v501 = vunpack.c.h.b16 %v219
    %v502 = vunpack.c.l.b16 %v220
    %v503 = vunpack.c.h.b16 %v220
    %v504 = vunpack.c.l.b16 %v221
    %v505 = vunpack.c.h.b16 %v221
    %v506 = vunpack.c.l.b16 %v222
    %v507 = vunpack.c.h.b16 %v222
    %v508 = vunpack.c.l.b16 %v223
    %v509 = vunpack.c.h.b16 %v223
    %v510 = vunpack.c.l.b16 %v224
    %v511 = vunpack.c.h.b16 %v224
    %v512 = vunpack.c.l.b16 %v225
    %v513 = vunpack.c.h.b16 %v225
    %v514 = vunpack.c.l.b16 %v226
    %v515 = vunpack.c.h.b16 %v226
    %v516 = vunpack.c.l.b16 %v227
    %v517 = vunpack.c.h.b16 %v227
    %v518 = vunpack.c.l.b16 %v228
    %v519 = vunpack.c.h.b16 %v228
    %v520 = vunpack.c.l.b16 %v229
    %v521 = vunpack.c.h.b16 %v229
    %v522 = vunpack.c.l.b16 %v230
    %v523 = vunpack.c.h.b16 %v230
    %v524 = vunpack.c.l.b16 %v231
    %v525 = vunpack.c.h.b16 %v231
    %v526 = vunpack.c.l.b16 %v232
    %v527 = vunpack.c.h.b16 %v232
    %v528 = vunpack.c.l.b16 %v233
    %v529 = vunpack.c.h.b16 %v233
    %v530 = vunpack.c.l.b16 %v234
    %v531 = vunpack.c.h.b16 %v234
    %v532 = vunpack.c.l.b16 %v235
    %v533 = vunpack.c.h.b16 %v235
    %v534 = vunpack.c.l.b16 %v236
    %v535 = vunpack.c.h.b16 %v236
    %v536 = vunpack.c.l.b16 %v237
    %v537 = vunpack.c.h.b16 %v237
    %v538 = vunpack.c.l.b16 %v238
    %v539 = vunpack.c.h.b16 %v238
    %v540 = vunpack.c.l.b16 %v239
    %v541 = vunpack.c.h.b16 %v239
    %v542 = vunpack.c.l.b16 %v240
    %v543 = vunpack.c.h.b16 %v240
    %v544 = vunpack.c.l.b16 %v241
    %v545 = vunpack.c.h.b16 %v241
    %v546 = vunpack.c.l.b16 %v242
    %v547 = vunpack.c.h.b16 %v242
    %v548 = vunpack.c.l.b16 %v243
    %v549 = vunpack.c.h.b16 %v243
    %v550 = vunpack.c.l.b16 %v244
    %v551 = vunpack.c.h.b16 %v244
    %v552 = vunpack.c.l.b16 %v245
    %v553 = vunpack.c.h.b16 %v245
    %v554 = vunpack.c.l.b16 %v246
    %v555 = vunpack.c.h.b16 %v246
    %v556 = vunpack.c.l.b16 %v247
    %v557 = vunpack.c.h.b16 %v247
    %v558 = vunpack.c.l.b16 %v248
    %v559 = vunpack.c.h.b16 %v248
    %v560 = vunpack.c.l.b16 %v249
    %v561 = vunpack.c.h.b16 %v249
    %v562 = vunpack.c.l.b16 %v250
    %v563 = vunpack.c.h.b16 %v250
    %v564 = vunpack.c.l.b16 %v251
    %v565 = vunpack.c.h.b16 %v251
    %v566 = vunpack.c.l.b16 %v252
    %v567 = vunpack.c.h.b16 %v252
    %v568 = vunpack.c.l.b16 %v253
    %v569 = vunpack.c.h.b16 %v253
    %v570 = vunpack.c.l.b16 %v254
    %v571 = vunpack.c.h.b16 %v254
    %v572 = vunpack.c.l.b16 %v255
    %v573 = vunpack.c.h.b16 %v255
    %v574 = vunpack.c.l.b16 %v256
    %v575 = vunpack.c.h.b16 %v256
    %v576 = vunpack.c.l.b16 %v257
    %v577 = vunpack.c.h.b16 %v257
    %v578 = vunpack.c.l.b16 %v258
    %v579 = vunpack.c.h.b16 %v258
    %v580 = vunpack.c.l.b16 %v259
    %v581 = vunpack.c.h.b16 %v259
    %v582 = vunpack.c.l.b16 %v260
    %v583 = vunpack.c.h.b16 %v260
    %v584 = vunpack.c.l.b16 %v261
    %v585 = vunpack.c.h.b16 %v261
    %v586 = vunpack.c.l.b16 %v262
    %v587 = vunpack.c.h.b16 %v262
    %v588 = vunpack.c.l.b16 %v263
    %v589 = vunpack.c.h.b16 %v263
    %v590 = vunpack.c.l.b16 %v264
    %v591 = vunpack.c.h.b16 %v264
    %v592 = vunpack.c.l.b16 %v265
    %v593 = vunpack.c.h.b16 %v265
    %v594 = vunpack.c.l.b16 %v266
    %v595 = vunpack.c.h.b16 %v266
    %v596 = vunpack.c.l.b16 %v267
    %v597 = vunpack.c.h.b16 %v267
    %v598 = vunpack.c.l.b16 %v268
    %v599 = vunpack.c.h.b16 %v268
    %v600 = vunpack.c.l.b16 %v269
    %v601 = vunpack.c.h.b16 %v269
    %v602 = vunpack.c.l.b16 %v270
    %v603 = vunpack.c.h.b16 %v270
    %v604 = vunpack.c.l.b16 %v271
    %v605 = vunpack.c.h.b16 %v271
    %v606 = vunpack.c.l.b16 %v272
    %v607 = vunpack.c.h.b16 %v272
    %v608 = vunpack.c.l.b16 %v273
    %v609 = vunpack.c.h.b16 %v273
    %v610 = vunpack.c.l.b16 %v274
    %v611 = vunpack.c.h.b16 %v274
    %v612 = vunpack.c.l.b16 %v275
    %v613 = vunpack.c.h.b16 %v275
    %v614 = vunpack.c.l.b16 %v276
    %v615 = vunpack.c.h.b16 %v276
    %v616 = vunpack.c.l.b16 %v277
    %v617 = vunpack.c.h.b16 %v277
    %v618 = vunpack.c.l.b16 %v278
    %v619 = vunpack.c.h.b16 %v278
    %v620 = vunpack.c.l.b16 %v279
    %v621 = vunpack.c.h.b16 %v279
    %v622 = vunpack.c.l.b16 %v280
    %v623 = vunpack.c.h.b16 %v280
    %v624 = vunpack.c.l.b16 %v281
    %v625 = vunpack.c.h.b16 %v281
    %v626 = vunpack.c.l.b16 %v282
    %v627 = vunpack.c.h.b16 %v282
    %v628 = vunpack.c.l.b16 %v283
    %v629 = vunpack.c.h.b16 %v283
    %v630 = vunpack.c.l.b16 %v284
    %v631 = vunpack.c.h.b16 %v284
    %v632 = vunpack.c.l.b16 %v285
    %v633 = vunpack.c.h.b16 %v285
    %v634 = vunpack.c.l.b16 %v286
    %v635 = vunpack.c.h.b16 %v286
    %v636 = vunpack.c.l.b16 %v287
    %v637 = vunpack.c.h.b16 %v287
    %v638 = vunpack.c.l.b16 %v288
    %v639 = vunpack.c.h.b16 %v288
    %v640 = vunpack.c.l.b16 %v289
    %v641 = vunpack.c.h.b16 %v289
    %v642 = vunpack.c.l.b16 %v290
    %v643 = vunpack.c.h.b16 %v290
    %v644 = vunpack.c.l.b16 %v291
    %v645 = vunpack.c.h.b16 %v291
    %v646 = vunpack.c.l.b16 %v292
    %v647 = vunpack.c.h.b16 %v292
    %v648 = vunpack.c.l.b16 %v293
    %v649 = vunpack.c.h.b16 %v293
    %v650 = vunpack.c.l.b16 %v294
    %v651 = vunpack.c.h.b16 %v294
    %v652 = vunpack.c.l.b16 %v295
    %v653 = vunpack.c.h.b16 %v295
    %v654 = vunpack.c.l.b16 %v296
    %v655 = vunpack.c.h.b16 %v296
    %v656 = vunpack.c.l.b16 %v297
    %v657 = vunpack.c.h.b16 %v297
    %v658 = vunpack.c.l.b16 %v298
    %v659 = vunpack.c.h.b16 %v298
    %v660 = vunpack.c.l.b16 %v299
    %v661 = vunpack.c.h.b16 %v299
    %v662 = vunpack.c.l.b16 %v300
    %v663 = vunpack.c.h.b16 %v300
    %v664 = vunpack.c.l.b16 %v301
    %v665 = vunpack.c.h.b16 %v301
    %v666 = vunpack.c.l.b16 %v302
    %v667 = vunpack.c.h.b16 %v302
    %v668 = vunpack.c.l.b16 %v303
    %v669 = vunpack.c.h.b16 %v303
    %v670 = vunpack.c.l.b16 %v304
    %v671 = vunpack.c.h.b16 %v304
    %v672 = vunpack.c.l.b16 %v305
    %v673 = vunpack.c.h.b16 %v305
    %v674 = vunpack.c.l.b16 %v306
    %v675 = vunpack.c.h.b16 %v306
    %v676 = vunpack.c.l.b16 %v307
    %v677 = vunpack.c.h.b16 %v307
    %v678 = vunpack.c.l.b16 %v308
    %v679 = vunpack.c.h.b16 %v308
    %v680 = vunpack.c.l.b16 %v309
    %v681 = vunpack.c.h.b16 %v309
    %v682 = vunpack.c.l.b16 %v310
    %v683 = vunpack.c.h.b16 %v310
    %v684 = vunpack.c.l.b16 %v311
    %v685 = vunpack.c.h.b16 %v311
    %v686 = vunpack.c.l.b16 %v312
    %v687 = vunpack.c.h.b16 %v312
    %v688 = vunpack.c.l.b16 %v313
    %v689 = vunpack.c.h.b16 %v313
    %v690 = vunpack.c.l.b16 %v314
    %v691 = vunpack.c.h.b16 %v314
    %v692 = vunpack.c.l.b16 %v315
    %v693 = vunpack.c.h.b16 %v315
    %v694 = vunpack.c.l.b16 %v316
    %v695 = vunpack.c.h.b16 %v316
    %v696 = vunpack.c.l.b16 %v317
    %v697 = vunpack.c.h.b16 %v317
    %v698 = vunpack.c.l.b16 %v318
    %v699 = vunpack.c.h.b16 %v318
    %v700 = vunpack.c.l.b16 %v319
    %v701 = vunpack.c.h.b16 %v319
    %v702 = vunpack.c.l.b16 %v320
    %v703 = vunpack.c.h.b16 %v320
    %v704 = vunpack.c.l.b16 %v321
    %v705 = vunpack.c.h.b16 %v321
    %v706 = vunpack.c.l.b16 %v322
    %v707 = vunpack.c.h.b16 %v322
    %v708 = vunpack.c.l.b16 %v323
    %v709 = vunpack.c.h.b16 %v323
    %v710 = vunpack.c.l.b16 %v324
    %v711 = vunpack.c.h.b16 %v324
    %v712 = vunpack.c.l.b16 %v325
    %v713 = vunpack.c.h.b16 %v325
    %v714 = vunpack.c.l.b16 %v326
    %v715 = vunpack.c.h.b16 %v326
    %v716 = vunpack.c.l.b16 %v327
    %v717 = vunpack.c.h.b16 %v327
    %v718 = vunpack.c.l.b16 %v328
    %v719 = vunpack.c.h.b16 %v328
    %v720 = vunpack.c.l.b16 %v329
    %v721 = vunpack.c.h.b16 %v329
    %v722 = vunpack.c.l.b16 %v330
    %v723 = vunpack.c.h.b16 %v330
    %v724 = vunpack.c.l.b16 %v331
    %v725 = vunpack.c.h.b16 %v331
    %v726 = vunpack.c.l.b16 %v332
    %v727 = vunpack.c.h.b16 %v332
    %v728 = vunpack.c.l.b16 %v333
    %v729 = vunpack.c.h.b16 %v333
    %v730 = vunpack.c.l.b16 %v334
    %v731 = vunpack.c.h.b16 %v334
    %v732 = vunpack.c.l.b16 %v335
    %v733 = vunpack.c.h.b16 %v335
    %v734 = vpack.c.b16 %v482, %v478
    %v735 = vpack.c.b16 %v483, %v479
    %v736 = vpack.c.b16 %v484, %v480
    %v737 = vpack.c.b16 %v485, %v481
    %v738 = vpack.c.b16 %v490, %v486
    %v739 = vpack.c.b16 %v491, %v487
    %v740 = vpack.c.b16 %v492, %v488
    %v741 = vpack.c.b16 %v493, %v489
    %v742 = vpack.c.b16 %v498, %v494
    %v743 = vpack.c.b16 %v499, %v495
    %v744 = vpack.c.b16 %v500, %v496
    %v745 = vpack.c.b16 %v501, %v497
    %v746 = vpack.c.b16 %v506, %v502
    %v747 = vpack.c.b16 %v507, %v503
    %v748 = vpack.c.b16 %v508, %v504
    %v749 = vpack.c.b16 %v509, %v505
    %v750 = vpack.c.b16 %v514, %v510
    %v751 = vpack.c.b16 %v515, %v511
    %v752 = vpack.c.b16 %v516, %v512
    %v753 = vpack.c.b16 %v517, %v513
    %v754 = vpack.c.b16 %v522, %v518
    %v755 = vpack.c.b16 %v523, %v519
    %v756 = vpack.c.b16 %v524, %v520
    %v757 = vpack.c.b16 %v525, %v521
    %v758 = vpack.c.b16 %v530, %v526
    %v759 = vpack.c.b16 %v531, %v527
    %v760 = vpack.c.b16 %v532, %v528
    %v761 = vpack.c.b16 %v533, %v529
    %v762 = vpack.c.b16 %v538, %v534
    %v763 = vpack.c.b16 %v539, %v535
    %v764 = vpack.c.b16 %v540, %v536
    %v765 = vpack.c.b16 %v541, %v537
    %v766 = vpack.c.b16 %v546, %v542
    %v767 = vpack.c.b16 %v547, %v543
    %v768 = vpack.c.b16 %v548, %v544
    %v769 = vpack.c.b16 %v549, %v545
    %v770 = vpack.c.b16 %v554, %v550
    %v771 = vpack.c.b16 %v555, %v551
    %v772 = vpack.c.b16 %v556, %v552
    %v773 = vpack.c.b16 %v557, %v553
    %v774 = vpack.c.b16 %v562, %v558
    %v775 = vpack.c.b16 %v563, %v559
    %v776 = vpack.c.b16 %v564, %v560
    %v777 = vpack.c.b16 %v565, %v561
    %v778 = vpack.c.b16 %v570, %v566
    %v779 = vpack.c.b16 %v571, %v567
    %v780 = vpack.c.b16 %v572, %v568
    %v781 = vpack.c.b16 %v573, %v569
    %v782 = vpack.c.b16 %v578, %v574
    %v783 = vpack.c.b16 %v579, %v575
    %v784 = vpack.c.b16 %v580, %v576
    %v785 = vpack.c.b16 %v581, %v577
    %v786 = vpack.c.b16 %v586, %v582
    %v787 = vpack.c.b16 %v587, %v583
    %v788 = vpack.c.b16 %v588, %v584
    %v789 = vpack.c.b16 %v589, %v585
    %v790 = vpack.c.b16 %v594, %v590
    %v791 = vpack.c.b16 %v595, %v591
    %v792 = vpack.c.b16 %v596, %v592
    %v793 = vpack.c.b16 %v597, %v593
    %v794 = vpack.c.b16 %v602, %v598
    %v795 = vpack.c.b16 %v603, %v599
    %v796 = vpack.c.b16 %v604, %v600
    %v797 = vpack.c.b16 %v605, %v601
    %v798 = vpack.c.b16 %v610, %v606
    %v799 = vpack.c.b16 %v611, %v607
    %v800 = vpack.c.b16 %v612, %v608
    %v801 = vpack.c.b16 %v613, %v609
    %v802 = vpack.c.b16 %v618, %v614
    %v803 = vpack.c.b16 %v619, %v615
    %v804 = vpack.c.b16 %v620, %v616
    %v805 = vpack.c.b16 %v621, %v617
    %v806 = vpack.c.b16 %v626, %v622
    %v807 = vpack.c.b16 %v627, %v623
    %v808 = vpack.c.b16 %v628, %v624
    %v809 = vpack.c.b16 %v629, %v625
    %v810 = vpack.c.b16 %v634, %v630
    %v811 = vpack.c.b16 %v635, %v631
    %v812 = vpack.c.b16 %v636, %v632
    %v813 = vpack.c.b16 %v637, %v633
    %v814 = vpack.c.b16 %v642, %v638
    %v815 = vpack.c.b16 %v643, %v639
    %v816 = vpack.c.b16 %v644, %v640
    %v817 = vpack.c.b16 %v645, %v641
    %v818 = vpack.c.b16 %v650, %v646
    %v819 = vpack.c.b16 %v651, %v647
    %v820 = vpack.c.b16 %v652, %v648
    %v821 = vpack.c.b16 %v653, %v649
    %v822 = vpack.c.b16 %v658, %v654
    %v823 = vpack.c.b16 %v659, %v655
    %v824 = vpack.c.b16 %v660, %v656
    %v825 = vpack.c.b16 %v661, %v657
    %v826 = vpack.c.b16 %v666, %v662
    %v827 = vpack.c.b16 %v667, %v663
    %v828 = vpack.c.b16 %v668, %v664
    %v829 = vpack.c.b16 %v669, %v665
    %v830 = vpack.c.b16 %v674, %v670
    %v831 = vpack.c.b16 %v675, %v671
    %v832 = vpack.c.b16 %v676, %v672
    %v833 = vpack.c.b16 %v677, %v673
    %v834 = vpack.c.b16 %v682, %v678
    %v835 = vpack.c.b16 %v683, %v679
    %v836 = vpack.c.b16 %v684, %v680
    %v837 = vpack.c.b16 %v685, %v681
    %v838 = vpack.c.b16 %v690, %v686
    %v839 = vpack.c.b16 %v691, %v687
    %v840 = vpack.c.b16 %v692, %v688
    %v841 = vpack.c.b16 %v693, %v689
    %v842 = vpack.c.b16 %v698, %v694
    %v843 = vpack.c.b16 %v699, %v695
    %v844 = vpack.c.b16 %v700, %v696
    %v845 = vpack.c.b16 %v701, %v697
    %v846 = vpack.c.b16 %v706, %v702
    %v847 = vpack.c.b16 %v707, %v703
    %v848 = vpack.c.b16 %v708, %v704
    %v849 = vpack.c.b16 %v709, %v705
    %v850 = vpack.c.b16 %v714, %v710
    %v851 = vpack.c.b16 %v715, %v711
    %v852 = vpack.c.b16 %v716, %v712
    %v853 = vpack.c.b16 %v717, %v713
    %v854 = vpack.c.b16 %v722, %v718
    %v855 = vpack.c.b16 %v723, %v719
    %v856 = vpack.c.b16 %v724, %v720
    %v857 = vpack.c.b16 %v725, %v721
    %v858 = vpack.c.b16 %v730, %v726
    %v859 = vpack.c.b16 %v731, %v727
    %v860 = vpack.c.b16 %v732, %v728
    %v861 = vpack.c.b16 %v733, %v729
    %990 = vmatprep.subr.bf16.mxu0 %v735
    %991 = vmatpush1.bf16.msra.mxu0 %v734
    %992 = vmatprep.subr.bf16.mxu0 %v739
    %993 = vmatpush1.bf16.msra.mxu0 %v738
    %994 = vmatprep.subr.bf16.mxu0 %v743
    %995 = vmatpush1.bf16.msra.mxu0 %v742
    %996 = vmatprep.subr.bf16.mxu0 %v747
    %997 = vmatpush1.bf16.msra.mxu0 %v746
    %998 = vmatprep.subr.bf16.mxu0 %v751
    %999 = vmatpush1.bf16.msra.mxu0 %v750
    %1000 = vmatprep.subr.bf16.mxu0 %v755
    %1001 = vmatpush1.bf16.msra.mxu0 %v754
    %1002 = vmatprep.subr.bf16.mxu0 %v759
    %1003 = vmatpush1.bf16.msra.mxu0 %v758
    %1004 = vmatprep.subr.bf16.mxu0 %v763
    %1005 = vmatpush1.bf16.msra.mxu0 %v762
    %1006 = vmatprep.subr.bf16.mxu0 %v767
    %1007 = vmatpush1.bf16.msra.mxu0 %v766
    %1008 = vmatprep.subr.bf16.mxu0 %v771
    %1009 = vmatpush1.bf16.msra.mxu0 %v770
    %1010 = vmatprep.subr.bf16.mxu0 %v775
    %1011 = vmatpush1.bf16.msra.mxu0 %v774
    %1012 = vmatprep.subr.bf16.mxu0 %v779
    %1013 = vmatpush1.bf16.msra.mxu0 %v778
    %1014 = vmatprep.subr.bf16.mxu0 %v783
    %1015 = vmatpush1.bf16.msra.mxu0 %v782
    %1016 = vmatprep.subr.bf16.mxu0 %v787
    %1017 = vmatpush1.bf16.msra.mxu0 %v786
    %1018 = vmatprep.subr.bf16.mxu0 %v791
    %1019 = vmatpush1.bf16.msra.mxu0 %v790
    %1020 = vmatprep.subr.bf16.mxu0 %v795
    %1021 = vmatpush1.bf16.msra.mxu0 %v794
    %1022 = vmatprep.mubr.bf16.mxu0 %v343
    %1023 = vmatmul.mubr.bf16.gmra.mrb[0].mxu0 %v342
    %v1024 = vpop.f32.mrb[0].mxu0
    %v1025 = vadd.f32 0.0, %v1024
    %v1026 = vpop.f32.mrb[0].mxu0
    %v1027 = vadd.f32 0.0, %v1026
    %v1028 = vpop.f32.mrb[0].mxu0
    %v1029 = vpop.f32.mrb[0].mxu0
    %1030 = vdwg.mxu0
    %1031 = vmatprep.subr.bf16.mxu0 %v799
    %1032 = vmatpush1.bf16.msra.mxu0 %v798
    %1033 = vmatprep.subr.bf16.mxu0 %v803
    %1034 = vmatpush1.bf16.msra.mxu0 %v802
    %1035 = vmatprep.subr.bf16.mxu0 %v807
    %1036 = vmatpush1.bf16.msra.mxu0 %v806
    %1037 = vmatprep.subr.bf16.mxu0 %v811
    %1038 = vmatpush1.bf16.msra.mxu0 %v810
    %1039 = vmatprep.subr.bf16.mxu0 %v815
    %1040 = vmatpush1.bf16.msra.mxu0 %v814
    %1041 = vmatprep.subr.bf16.mxu0 %v819
    %1042 = vmatpush1.bf16.msra.mxu0 %v818
    %1043 = vmatprep.subr.bf16.mxu0 %v823
    %1044 = vmatpush1.bf16.msra.mxu0 %v822
    %1045 = vmatprep.subr.bf16.mxu0 %v827
    %1046 = vmatpush1.bf16.msra.mxu0 %v826
    %1047 = vmatprep.subr.bf16.mxu0 %v831
    %1048 = vmatpush1.bf16.msra.mxu0 %v830
    %1049 = vmatprep.subr.bf16.mxu0 %v835
    %1050 = vmatpush1.bf16.msra.mxu0 %v834
    %1051 = vmatprep.subr.bf16.mxu0 %v839
    %1052 = vmatpush1.bf16.msra.mxu0 %v838
    %1053 = vmatprep.subr.bf16.mxu0 %v843
    %1054 = vmatpush1.bf16.msra.mxu0 %v842
    %1055 = vmatprep.subr.bf16.mxu0 %v847
    %1056 = vmatpush1.bf16.msra.mxu0 %v846
    %1057 = vmatprep.subr.bf16.mxu0 %v851
    %1058 = vmatpush1.bf16.msra.mxu0 %v850
    %1059 = vmatprep.subr.bf16.mxu0 %v855
    %1060 = vmatpush1.bf16.msra.mxu0 %v854
    %1061 = vmatprep.subr.bf16.mxu0 %v859
    %1062 = vmatpush1.bf16.msra.mxu0 %v858
    %1063 = vmatprep.mubr.bf16.mxu0 %v345
    %1064 = vmatmul.mubr.bf16.gmra.mrb[0].mxu0 %v344
    %v1065 = vpop.f32.mrb[0].mxu0
    %v1066 = vadd.f32 %v1025, %v1065
    %v1067 = vpop.f32.mrb[0].mxu0
    %v1068 = vadd.f32 %v1027, %v1067
    %v1069 = vpop.f32.mrb[0].mxu0
    %v1070 = vpop.f32.mrb[0].mxu0
    %1071 = vdwg.mxu0
    %1072 = vmatprep.subr.bf16.mxu0 %v737
    %1073 = vmatpush1.bf16.msra.mxu0 %v736
    %1074 = vmatprep.subr.bf16.mxu0 %v741
    %1075 = vmatpush1.bf16.msra.mxu0 %v740
    %1076 = vmatprep.subr.bf16.mxu0 %v745
    %1077 = vmatpush1.bf16.msra.mxu0 %v744
    %1078 = vmatprep.subr.bf16.mxu0 %v749
    %1079 = vmatpush1.bf16.msra.mxu0 %v748
    %1080 = vmatprep.subr.bf16.mxu0 %v753
    %1081 = vmatpush1.bf16.msra.mxu0 %v752
    %1082 = vmatprep.subr.bf16.mxu0 %v757
    %1083 = vmatpush1.bf16.msra.mxu0 %v756
    %1084 = vmatprep.subr.bf16.mxu0 %v761
    %1085 = vmatpush1.bf16.msra.mxu0 %v760
    %1086 = vmatprep.subr.bf16.mxu0 %v765
    %1087 = vmatpush1.bf16.msra.mxu0 %v764
    %1088 = vmatprep.subr.bf16.mxu0 %v769
    %1089 = vmatpush1.bf16.msra.mxu0 %v768
    %1090 = vmatprep.subr.bf16.mxu0 %v773
    %1091 = vmatpush1.bf16.msra.mxu0 %v772
    %1092 = vmatprep.subr.bf16.mxu0 %v777
    %1093 = vmatpush1.bf16.msra.mxu0 %v776
    %1094 = vmatprep.subr.bf16.mxu0 %v781
    %1095 = vmatpush1.bf16.msra.mxu0 %v780
    %1096 = vmatprep.subr.bf16.mxu0 %v785
    %1097 = vmatpush1.bf16.msra.mxu0 %v784
    %1098 = vmatprep.subr.bf16.mxu0 %v789
    %1099 = vmatpush1.bf16.msra.mxu0 %v788
    %1100 = vmatprep.subr.bf16.mxu0 %v793
    %1101 = vmatpush1.bf16.msra.mxu0 %v792
    %1102 = vmatprep.subr.bf16.mxu0 %v797
    %1103 = vmatpush1.bf16.msra.mxu0 %v796
    %1104 = vmatprep.mubr.bf16.mxu0 %v343
    %1105 = vmatmul.mubr.bf16.gmra.mrb[0].mxu0 %v342
    %v1106 = vpop.f32.mrb[0].mxu0
    %v1107 = vadd.f32 0.0, %v1106
    %v1108 = vpop.f32.mrb[0].mxu0
    %v1109 = vadd.f32 0.0, %v1108
    %v1110 = vpop.f32.mrb[0].mxu0
    %v1111 = vpop.f32.mrb[0].mxu0
    %1112 = vdwg.mxu0
    %1113 = vmatprep.subr.bf16.mxu0 %v801
    %1114 = vmatpush1.bf16.msra.mxu0 %v800
    %1115 = vmatprep.subr.bf16.mxu0 %v805
    %1116 = vmatpush1.bf16.msra.mxu0 %v804
    %1117 = vmatprep.subr.bf16.mxu0 %v809
    %1118 = vmatpush1.bf16.msra.mxu0 %v808
    %1119 = vmatprep.subr.bf16.mxu0 %v813
    %1120 = vmatpush1.bf16.msra.mxu0 %v812
    %1121 = vmatprep.subr.bf16.mxu0 %v817
    %1122 = vmatpush1.bf16.msra.mxu0 %v816
    %1123 = vmatprep.subr.bf16.mxu0 %v821
    %1124 = vmatpush1.bf16.msra.mxu0 %v820
    %1125 = vmatprep.subr.bf16.mxu0 %v825
    %1126 = vmatpush1.bf16.msra.mxu0 %v824
    %1127 = vmatprep.subr.bf16.mxu0 %v829
    %1128 = vmatpush1.bf16.msra.mxu0 %v828
    %1129 = vmatprep.subr.bf16.mxu0 %v833
    %1130 = vmatpush1.bf16.msra.mxu0 %v832
    %1131 = vmatprep.subr.bf16.mxu0 %v837
    %1132 = vmatpush1.bf16.msra.mxu0 %v836
    %1133 = vmatprep.subr.bf16.mxu0 %v841
    %1134 = vmatpush1.bf16.msra.mxu0 %v840
    %1135 = vmatprep.subr.bf16.mxu0 %v845
    %1136 = vmatpush1.bf16.msra.mxu0 %v844
    %1137 = vmatprep.subr.bf16.mxu0 %v849
    %1138 = vmatpush1.bf16.msra.mxu0 %v848
    %1139 = vmatprep.subr.bf16.mxu0 %v853
    %1140 = vmatpush1.bf16.msra.mxu0 %v852
    %1141 = vmatprep.subr.bf16.mxu0 %v857
    %1142 = vmatpush1.bf16.msra.mxu0 %v856
    %1143 = vmatprep.subr.bf16.mxu0 %v861
    %1144 = vmatpush1.bf16.msra.mxu0 %v860
    %1145 = vmatprep.mubr.bf16.mxu0 %v345
    %1146 = vmatmul.mubr.bf16.gmra.mrb[0].mxu0 %v344
    %v1147 = vpop.f32.mrb[0].mxu0
    %v1148 = vadd.f32 %v1107, %v1147
    %v1149 = vpop.f32.mrb[0].mxu0
    %v1150 = vadd.f32 %v1109, %v1149
    %v1151 = vpop.f32.mrb[0].mxu0
    %v1152 = vpop.f32.mrb[0].mxu0
    %1153 = vdwg.mxu0
    %v1156 = vunpack.c.l.b16 %v76
    %v1157 = vunpack.c.h.b16 %v76
    %v1158 = vunpack.c.l.b16 %v77
    %v1159 = vunpack.c.h.b16 %v77
    %v1160 = vpack.c.b16 %v1156, %v1156
    %v1161 = vpack.c.b16 %v1157, %v1157
    %v1162 = vpack.c.b16 %v1158, %v1158
    %v1163 = vpack.c.b16 %v1159, %v1159
    %v1296 = vunpack.c.l.b16 %v78
    %v1297 = vunpack.c.h.b16 %v78
    %v1298 = vunpack.c.l.b16 %v79
    %v1299 = vunpack.c.h.b16 %v79
    %v1300 = vunpack.c.l.b16 %v80
    %v1301 = vunpack.c.h.b16 %v80
    %v1302 = vunpack.c.l.b16 %v81
    %v1303 = vunpack.c.h.b16 %v81
    %v1304 = vunpack.c.l.b16 %v82
    %v1305 = vunpack.c.h.b16 %v82
    %v1306 = vunpack.c.l.b16 %v83
    %v1307 = vunpack.c.h.b16 %v83
    %v1308 = vunpack.c.l.b16 %v84
    %v1309 = vunpack.c.h.b16 %v84
    %v1310 = vunpack.c.l.b16 %v85
    %v1311 = vunpack.c.h.b16 %v85
    %v1312 = vunpack.c.l.b16 %v86
    %v1313 = vunpack.c.h.b16 %v86
    %v1314 = vunpack.c.l.b16 %v87
    %v1315 = vunpack.c.h.b16 %v87
    %v1316 = vunpack.c.l.b16 %v88
    %v1317 = vunpack.c.h.b16 %v88
    %v1318 = vunpack.c.l.b16 %v89
    %v1319 = vunpack.c.h.b16 %v89
    %v1320 = vunpack.c.l.b16 %v90
    %v1321 = vunpack.c.h.b16 %v90
    %v1322 = vunpack.c.l.b16 %v91
    %v1323 = vunpack.c.h.b16 %v91
    %v1324 = vunpack.c.l.b16 %v92
    %v1325 = vunpack.c.h.b16 %v92
    %v1326 = vunpack.c.l.b16 %v93
    %v1327 = vunpack.c.h.b16 %v93
    %v1328 = vunpack.c.l.b16 %v94
    %v1329 = vunpack.c.h.b16 %v94
    %v1330 = vunpack.c.l.b16 %v95
    %v1331 = vunpack.c.h.b16 %v95
    %v1332 = vunpack.c.l.b16 %v96
    %v1333 = vunpack.c.h.b16 %v96
    %v1334 = vunpack.c.l.b16 %v97
    %v1335 = vunpack.c.h.b16 %v97
    %v1336 = vunpack.c.l.b16 %v98
    %v1337 = vunpack.c.h.b16 %v98
    %v1338 = vunpack.c.l.b16 %v99
    %v1339 = vunpack.c.h.b16 %v99
    %v1340 = vunpack.c.l.b16 %v100
    %v1341 = vunpack.c.h.b16 %v100
    %v1342 = vunpack.c.l.b16 %v101
    %v1343 = vunpack.c.h.b16 %v101
    %v1344 = vunpack.c.l.b16 %v102
    %v1345 = vunpack.c.h.b16 %v102
    %v1346 = vunpack.c.l.b16 %v103
    %v1347 = vunpack.c.h.b16 %v103
    %v1348 = vunpack.c.l.b16 %v104
    %v1349 = vunpack.c.h.b16 %v104
    %v1350 = vunpack.c.l.b16 %v105
    %v1351 = vunpack.c.h.b16 %v105
    %v1352 = vunpack.c.l.b16 %v106
    %v1353 = vunpack.c.h.b16 %v106
    %v1354 = vunpack.c.l.b16 %v107
    %v1355 = vunpack.c.h.b16 %v107
    %v1356 = vunpack.c.l.b16 %v108
    %v1357 = vunpack.c.h.b16 %v108
    %v1358 = vunpack.c.l.b16 %v109
    %v1359 = vunpack.c.h.b16 %v109
    %v1360 = vunpack.c.l.b16 %v110
    %v1361 = vunpack.c.h.b16 %v110
    %v1362 = vunpack.c.l.b16 %v111
    %v1363 = vunpack.c.h.b16 %v111
    %v1364 = vunpack.c.l.b16 %v112
    %v1365 = vunpack.c.h.b16 %v112
    %v1366 = vunpack.c.l.b16 %v113
    %v1367 = vunpack.c.h.b16 %v113
    %v1368 = vunpack.c.l.b16 %v114
    %v1369 = vunpack.c.h.b16 %v114
    %v1370 = vunpack.c.l.b16 %v115
    %v1371 = vunpack.c.h.b16 %v115
    %v1372 = vunpack.c.l.b16 %v116
    %v1373 = vunpack.c.h.b16 %v116
    %v1374 = vunpack.c.l.b16 %v117
    %v1375 = vunpack.c.h.b16 %v117
    %v1376 = vunpack.c.l.b16 %v118
    %v1377 = vunpack.c.h.b16 %v118
    %v1378 = vunpack.c.l.b16 %v119
    %v1379 = vunpack.c.h.b16 %v119
    %v1380 = vunpack.c.l.b16 %v120
    %v1381 = vunpack.c.h.b16 %v120
    %v1382 = vunpack.c.l.b16 %v121
    %v1383 = vunpack.c.h.b16 %v121
    %v1384 = vunpack.c.l.b16 %v122
    %v1385 = vunpack.c.h.b16 %v122
    %v1386 = vunpack.c.l.b16 %v123
    %v1387 = vunpack.c.h.b16 %v123
    %v1388 = vunpack.c.l.b16 %v124
    %v1389 = vunpack.c.h.b16 %v124
    %v1390 = vunpack.c.l.b16 %v125
    %v1391 = vunpack.c.h.b16 %v125
    %v1392 = vunpack.c.l.b16 %v126
    %v1393 = vunpack.c.h.b16 %v126
    %v1394 = vunpack.c.l.b16 %v127
    %v1395 = vunpack.c.h.b16 %v127
    %v1396 = vunpack.c.l.b16 %v128
    %v1397 = vunpack.c.h.b16 %v128
    %v1398 = vunpack.c.l.b16 %v129
    %v1399 = vunpack.c.h.b16 %v129
    %v1400 = vunpack.c.l.b16 %v130
    %v1401 = vunpack.c.h.b16 %v130
    %v1402 = vunpack.c.l.b16 %v131
    %v1403 = vunpack.c.h.b16 %v131
    %v1404 = vunpack.c.l.b16 %v132
    %v1405 = vunpack.c.h.b16 %v132
    %v1406 = vunpack.c.l.b16 %v133
    %v1407 = vunpack.c.h.b16 %v133
    %v1408 = vunpack.c.l.b16 %v134
    %v1409 = vunpack.c.h.b16 %v134
    %v1410 = vunpack.c.l.b16 %v135
    %v1411 = vunpack.c.h.b16 %v135
    %v1412 = vunpack.c.l.b16 %v136
    %v1413 = vunpack.c.h.b16 %v136
    %v1414 = vunpack.c.l.b16 %v137
    %v1415 = vunpack.c.h.b16 %v137
    %v1416 = vunpack.c.l.b16 %v138
    %v1417 = vunpack.c.h.b16 %v138
    %v1418 = vunpack.c.l.b16 %v139
    %v1419 = vunpack.c.h.b16 %v139
    %v1420 = vunpack.c.l.b16 %v140
    %v1421 = vunpack.c.h.b16 %v140
    %v1422 = vunpack.c.l.b16 %v141
    %v1423 = vunpack.c.h.b16 %v141
    %v1424 = vunpack.c.l.b16 %v142
    %v1425 = vunpack.c.h.b16 %v142
    %v1426 = vunpack.c.l.b16 %v143
    %v1427 = vunpack.c.h.b16 %v143
    %v1428 = vunpack.c.l.b16 %v144
    %v1429 = vunpack.c.h.b16 %v144
    %v1430 = vunpack.c.l.b16 %v145
    %v1431 = vunpack.c.h.b16 %v145
    %v1432 = vunpack.c.l.b16 %v146
    %v1433 = vunpack.c.h.b16 %v146
    %v1434 = vunpack.c.l.b16 %v147
    %v1435 = vunpack.c.h.b16 %v147
    %v1436 = vunpack.c.l.b16 %v148
    %v1437 = vunpack.c.h.b16 %v148
    %v1438 = vunpack.c.l.b16 %v149
    %v1439 = vunpack.c.h.b16 %v149
    %v1440 = vunpack.c.l.b16 %v150
    %v1441 = vunpack.c.h.b16 %v150
    %v1442 = vunpack.c.l.b16 %v151
    %v1443 = vunpack.c.h.b16 %v151
    %v1444 = vunpack.c.l.b16 %v152
    %v1445 = vunpack.c.h.b16 %v152
    %v1446 = vunpack.c.l.b16 %v153
    %v1447 = vunpack.c.h.b16 %v153
    %v1448 = vunpack.c.l.b16 %v154
    %v1449 = vunpack.c.h.b16 %v154
    %v1450 = vunpack.c.l.b16 %v155
    %v1451 = vunpack.c.h.b16 %v155
    %v1452 = vunpack.c.l.b16 %v156
    %v1453 = vunpack.c.h.b16 %v156
    %v1454 = vunpack.c.l.b16 %v157
    %v1455 = vunpack.c.h.b16 %v157
    %v1456 = vunpack.c.l.b16 %v158
    %v1457 = vunpack.c.h.b16 %v158
    %v1458 = vunpack.c.l.b16 %v159
    %v1459 = vunpack.c.h.b16 %v159
    %v1460 = vunpack.c.l.b16 %v160
    %v1461 = vunpack.c.h.b16 %v160
    %v1462 = vunpack.c.l.b16 %v161
    %v1463 = vunpack.c.h.b16 %v161
    %v1464 = vunpack.c.l.b16 %v162
    %v1465 = vunpack.c.h.b16 %v162
    %v1466 = vunpack.c.l.b16 %v163
    %v1467 = vunpack.c.h.b16 %v163
    %v1468 = vunpack.c.l.b16 %v164
    %v1469 = vunpack.c.h.b16 %v164
    %v1470 = vunpack.c.l.b16 %v165
    %v1471 = vunpack.c.h.b16 %v165
    %v1472 = vunpack.c.l.b16 %v166
    %v1473 = vunpack.c.h.b16 %v166
    %v1474 = vunpack.c.l.b16 %v167
    %v1475 = vunpack.c.h.b16 %v167
    %v1476 = vunpack.c.l.b16 %v168
    %v1477 = vunpack.c.h.b16 %v168
    %v1478 = vunpack.c.l.b16 %v169
    %v1479 = vunpack.c.h.b16 %v169
    %v1480 = vunpack.c.l.b16 %v170
    %v1481 = vunpack.c.h.b16 %v170
    %v1482 = vunpack.c.l.b16 %v171
    %v1483 = vunpack.c.h.b16 %v171
    %v1484 = vunpack.c.l.b16 %v172
    %v1485 = vunpack.c.h.b16 %v172
    %v1486 = vunpack.c.l.b16 %v173
    %v1487 = vunpack.c.h.b16 %v173
    %v1488 = vunpack.c.l.b16 %v174
    %v1489 = vunpack.c.h.b16 %v174
    %v1490 = vunpack.c.l.b16 %v175
    %v1491 = vunpack.c.h.b16 %v175
    %v1492 = vunpack.c.l.b16 %v176
    %v1493 = vunpack.c.h.b16 %v176
    %v1494 = vunpack.c.l.b16 %v177
    %v1495 = vunpack.c.h.b16 %v177
    %v1496 = vunpack.c.l.b16 %v178
    %v1497 = vunpack.c.h.b16 %v178
    %v1498 = vunpack.c.l.b16 %v179
    %v1499 = vunpack.c.h.b16 %v179
    %v1500 = vunpack.c.l.b16 %v180
    %v1501 = vunpack.c.h.b16 %v180
    %v1502 = vunpack.c.l.b16 %v181
    %v1503 = vunpack.c.h.b16 %v181
    %v1504 = vunpack.c.l.b16 %v182
    %v1505 = vunpack.c.h.b16 %v182
    %v1506 = vunpack.c.l.b16 %v183
    %v1507 = vunpack.c.h.b16 %v183
    %v1508 = vunpack.c.l.b16 %v184
    %v1509 = vunpack.c.h.b16 %v184
    %v1510 = vunpack.c.l.b16 %v185
    %v1511 = vunpack.c.h.b16 %v185
    %v1512 = vunpack.c.l.b16 %v186
    %v1513 = vunpack.c.h.b16 %v186
    %v1514 = vunpack.c.l.b16 %v187
    %v1515 = vunpack.c.h.b16 %v187
    %v1516 = vunpack.c.l.b16 %v188
    %v1517 = vunpack.c.h.b16 %v188
    %v1518 = vunpack.c.l.b16 %v189
    %v1519 = vunpack.c.h.b16 %v189
    %v1520 = vunpack.c.l.b16 %v190
    %v1521 = vunpack.c.h.b16 %v190
    %v1522 = vunpack.c.l.b16 %v191
    %v1523 = vunpack.c.h.b16 %v191
    %v1524 = vunpack.c.l.b16 %v192
    %v1525 = vunpack.c.h.b16 %v192
    %v1526 = vunpack.c.l.b16 %v193
    %v1527 = vunpack.c.h.b16 %v193
    %v1528 = vunpack.c.l.b16 %v194
    %v1529 = vunpack.c.h.b16 %v194
    %v1530 = vunpack.c.l.b16 %v195
    %v1531 = vunpack.c.h.b16 %v195
    %v1532 = vunpack.c.l.b16 %v196
    %v1533 = vunpack.c.h.b16 %v196
    %v1534 = vunpack.c.l.b16 %v197
    %v1535 = vunpack.c.h.b16 %v197
    %v1536 = vunpack.c.l.b16 %v198
    %v1537 = vunpack.c.h.b16 %v198
    %v1538 = vunpack.c.l.b16 %v199
    %v1539 = vunpack.c.h.b16 %v199
    %v1540 = vunpack.c.l.b16 %v200
    %v1541 = vunpack.c.h.b16 %v200
    %v1542 = vunpack.c.l.b16 %v201
    %v1543 = vunpack.c.h.b16 %v201
    %v1544 = vunpack.c.l.b16 %v202
    %v1545 = vunpack.c.h.b16 %v202
    %v1546 = vunpack.c.l.b16 %v203
    %v1547 = vunpack.c.h.b16 %v203
    %v1548 = vunpack.c.l.b16 %v204
    %v1549 = vunpack.c.h.b16 %v204
    %v1550 = vunpack.c.l.b16 %v205
    %v1551 = vunpack.c.h.b16 %v205
    %v1552 = vpack.c.b16 %v1300, %v1296
    %v1553 = vpack.c.b16 %v1301, %v1297
    %v1554 = vpack.c.b16 %v1302, %v1298
    %v1555 = vpack.c.b16 %v1303, %v1299
    %v1556 = vpack.c.b16 %v1308, %v1304
    %v1557 = vpack.c.b16 %v1309, %v1305
    %v1558 = vpack.c.b16 %v1310, %v1306
    %v1559 = vpack.c.b16 %v1311, %v1307
    %v1560 = vpack.c.b16 %v1316, %v1312
    %v1561 = vpack.c.b16 %v1317, %v1313
    %v1562 = vpack.c.b16 %v1318, %v1314
    %v1563 = vpack.c.b16 %v1319, %v1315
    %v1564 = vpack.c.b16 %v1324, %v1320
    %v1565 = vpack.c.b16 %v1325, %v1321
    %v1566 = vpack.c.b16 %v1326, %v1322
    %v1567 = vpack.c.b16 %v1327, %v1323
    %v1568 = vpack.c.b16 %v1332, %v1328
    %v1569 = vpack.c.b16 %v1333, %v1329
    %v1570 = vpack.c.b16 %v1334, %v1330
    %v1571 = vpack.c.b16 %v1335, %v1331
    %v1572 = vpack.c.b16 %v1340, %v1336
    %v1573 = vpack.c.b16 %v1341, %v1337
    %v1574 = vpack.c.b16 %v1342, %v1338
    %v1575 = vpack.c.b16 %v1343, %v1339
    %v1576 = vpack.c.b16 %v1348, %v1344
    %v1577 = vpack.c.b16 %v1349, %v1345
    %v1578 = vpack.c.b16 %v1350, %v1346
    %v1579 = vpack.c.b16 %v1351, %v1347
    %v1580 = vpack.c.b16 %v1356, %v1352
    %v1581 = vpack.c.b16 %v1357, %v1353
    %v1582 = vpack.c.b16 %v1358, %v1354
    %v1583 = vpack.c.b16 %v1359, %v1355
    %v1584 = vpack.c.b16 %v1364, %v1360
    %v1585 = vpack.c.b16 %v1365, %v1361
    %v1586 = vpack.c.b16 %v1366, %v1362
    %v1587 = vpack.c.b16 %v1367, %v1363
    %v1588 = vpack.c.b16 %v1372, %v1368
    %v1589 = vpack.c.b16 %v1373, %v1369
    %v1590 = vpack.c.b16 %v1374, %v1370
    %v1591 = vpack.c.b16 %v1375, %v1371
    %v1592 = vpack.c.b16 %v1380, %v1376
    %v1593 = vpack.c.b16 %v1381, %v1377
    %v1594 = vpack.c.b16 %v1382, %v1378
    %v1595 = vpack.c.b16 %v1383, %v1379
    %v1596 = vpack.c.b16 %v1388, %v1384
    %v1597 = vpack.c.b16 %v1389, %v1385
    %v1598 = vpack.c.b16 %v1390, %v1386
    %v1599 = vpack.c.b16 %v1391, %v1387
    %v1600 = vpack.c.b16 %v1396, %v1392
    %v1601 = vpack.c.b16 %v1397, %v1393
    %v1602 = vpack.c.b16 %v1398, %v1394
    %v1603 = vpack.c.b16 %v1399, %v1395
    %v1604 = vpack.c.b16 %v1404, %v1400
    %v1605 = vpack.c.b16 %v1405, %v1401
    %v1606 = vpack.c.b16 %v1406, %v1402
    %v1607 = vpack.c.b16 %v1407, %v1403
    %v1608 = vpack.c.b16 %v1412, %v1408
    %v1609 = vpack.c.b16 %v1413, %v1409
    %v1610 = vpack.c.b16 %v1414, %v1410
    %v1611 = vpack.c.b16 %v1415, %v1411
    %v1612 = vpack.c.b16 %v1420, %v1416
    %v1613 = vpack.c.b16 %v1421, %v1417
    %v1614 = vpack.c.b16 %v1422, %v1418
    %v1615 = vpack.c.b16 %v1423, %v1419
    %v1616 = vpack.c.b16 %v1428, %v1424
    %v1617 = vpack.c.b16 %v1429, %v1425
    %v1618 = vpack.c.b16 %v1430, %v1426
    %v1619 = vpack.c.b16 %v1431, %v1427
    %v1620 = vpack.c.b16 %v1436, %v1432
    %v1621 = vpack.c.b16 %v1437, %v1433
    %v1622 = vpack.c.b16 %v1438, %v1434
    %v1623 = vpack.c.b16 %v1439, %v1435
    %v1624 = vpack.c.b16 %v1444, %v1440
    %v1625 = vpack.c.b16 %v1445, %v1441
    %v1626 = vpack.c.b16 %v1446, %v1442
    %v1627 = vpack.c.b16 %v1447, %v1443
    %v1628 = vpack.c.b16 %v1452, %v1448
    %v1629 = vpack.c.b16 %v1453, %v1449
    %v1630 = vpack.c.b16 %v1454, %v1450
    %v1631 = vpack.c.b16 %v1455, %v1451
    %v1632 = vpack.c.b16 %v1460, %v1456
    %v1633 = vpack.c.b16 %v1461, %v1457
    %v1634 = vpack.c.b16 %v1462, %v1458
    %v1635 = vpack.c.b16 %v1463, %v1459
    %v1636 = vpack.c.b16 %v1468, %v1464
    %v1637 = vpack.c.b16 %v1469, %v1465
    %v1638 = vpack.c.b16 %v1470, %v1466
    %v1639 = vpack.c.b16 %v1471, %v1467
    %v1640 = vpack.c.b16 %v1476, %v1472
    %v1641 = vpack.c.b16 %v1477, %v1473
    %v1642 = vpack.c.b16 %v1478, %v1474
    %v1643 = vpack.c.b16 %v1479, %v1475
    %v1644 = vpack.c.b16 %v1484, %v1480
    %v1645 = vpack.c.b16 %v1485, %v1481
    %v1646 = vpack.c.b16 %v1486, %v1482
    %v1647 = vpack.c.b16 %v1487, %v1483
    %v1648 = vpack.c.b16 %v1492, %v1488
    %v1649 = vpack.c.b16 %v1493, %v1489
    %v1650 = vpack.c.b16 %v1494, %v1490
    %v1651 = vpack.c.b16 %v1495, %v1491
    %v1652 = vpack.c.b16 %v1500, %v1496
    %v1653 = vpack.c.b16 %v1501, %v1497
    %v1654 = vpack.c.b16 %v1502, %v1498
    %v1655 = vpack.c.b16 %v1503, %v1499
    %v1656 = vpack.c.b16 %v1508, %v1504
    %v1657 = vpack.c.b16 %v1509, %v1505
    %v1658 = vpack.c.b16 %v1510, %v1506
    %v1659 = vpack.c.b16 %v1511, %v1507
    %v1660 = vpack.c.b16 %v1516, %v1512
    %v1661 = vpack.c.b16 %v1517, %v1513
    %v1662 = vpack.c.b16 %v1518, %v1514
    %v1663 = vpack.c.b16 %v1519, %v1515
    %v1664 = vpack.c.b16 %v1524, %v1520
    %v1665 = vpack.c.b16 %v1525, %v1521
    %v1666 = vpack.c.b16 %v1526, %v1522
    %v1667 = vpack.c.b16 %v1527, %v1523
    %v1668 = vpack.c.b16 %v1532, %v1528
    %v1669 = vpack.c.b16 %v1533, %v1529
    %v1670 = vpack.c.b16 %v1534, %v1530
    %v1671 = vpack.c.b16 %v1535, %v1531
    %v1672 = vpack.c.b16 %v1540, %v1536
    %v1673 = vpack.c.b16 %v1541, %v1537
    %v1674 = vpack.c.b16 %v1542, %v1538
    %v1675 = vpack.c.b16 %v1543, %v1539
    %v1676 = vpack.c.b16 %v1548, %v1544
    %v1677 = vpack.c.b16 %v1549, %v1545
    %v1678 = vpack.c.b16 %v1550, %v1546
    %v1679 = vpack.c.b16 %v1551, %v1547
    %1808 = vmatprep.subr.bf16.mxu0 %v1553
    %1809 = vmatpush1.bf16.msra.mxu0 %v1552
    %1810 = vmatprep.subr.bf16.mxu0 %v1557
    %1811 = vmatpush1.bf16.msra.mxu0 %v1556
    %1812 = vmatprep.subr.bf16.mxu0 %v1561
    %1813 = vmatpush1.bf16.msra.mxu0 %v1560
    %1814 = vmatprep.subr.bf16.mxu0 %v1565
    %1815 = vmatpush1.bf16.msra.mxu0 %v1564
    %1816 = vmatprep.subr.bf16.mxu0 %v1569
    %1817 = vmatpush1.bf16.msra.mxu0 %v1568
    %1818 = vmatprep.subr.bf16.mxu0 %v1573
    %1819 = vmatpush1.bf16.msra.mxu0 %v1572
    %1820 = vmatprep.subr.bf16.mxu0 %v1577
    %1821 = vmatpush1.bf16.msra.mxu0 %v1576
    %1822 = vmatprep.subr.bf16.mxu0 %v1581
    %1823 = vmatpush1.bf16.msra.mxu0 %v1580
    %1824 = vmatprep.subr.bf16.mxu0 %v1585
    %1825 = vmatpush1.bf16.msra.mxu0 %v1584
    %1826 = vmatprep.subr.bf16.mxu0 %v1589
    %1827 = vmatpush1.bf16.msra.mxu0 %v1588
    %1828 = vmatprep.subr.bf16.mxu0 %v1593
    %1829 = vmatpush1.bf16.msra.mxu0 %v1592
    %1830 = vmatprep.subr.bf16.mxu0 %v1597
    %1831 = vmatpush1.bf16.msra.mxu0 %v1596
    %1832 = vmatprep.subr.bf16.mxu0 %v1601
    %1833 = vmatpush1.bf16.msra.mxu0 %v1600
    %1834 = vmatprep.subr.bf16.mxu0 %v1605
    %1835 = vmatpush1.bf16.msra.mxu0 %v1604
    %1836 = vmatprep.subr.bf16.mxu0 %v1609
    %1837 = vmatpush1.bf16.msra.mxu0 %v1608
    %1838 = vmatprep.subr.bf16.mxu0 %v1613
    %1839 = vmatpush1.bf16.msra.mxu0 %v1612
    %1840 = vmatprep.mubr.bf16.mxu0 %v1161
    %1841 = vmatmul.mubr.bf16.gmra.mrb[0].mxu0 %v1160
    %v1842 = vpop.f32.mrb[0].mxu0
    %v1843 = vadd.f32 %v1066, %v1842
    %v1844 = vpop.f32.mrb[0].mxu0
    %v1845 = vadd.f32 %v1068, %v1844
    %v1846 = vpop.f32.mrb[0].mxu0
    %v1847 = vpop.f32.mrb[0].mxu0
    %1848 = vdwg.mxu0
    %1849 = vmatprep.subr.bf16.mxu0 %v1617
    %1850 = vmatpush1.bf16.msra.mxu0 %v1616
    %1851 = vmatprep.subr.bf16.mxu0 %v1621
    %1852 = vmatpush1.bf16.msra.mxu0 %v1620
    %1853 = vmatprep.subr.bf16.mxu0 %v1625
    %1854 = vmatpush1.bf16.msra.mxu0 %v1624
    %1855 = vmatprep.subr.bf16.mxu0 %v1629
    %1856 = vmatpush1.bf16.msra.mxu0 %v1628
    %1857 = vmatprep.subr.bf16.mxu0 %v1633
    %1858 = vmatpush1.bf16.msra.mxu0 %v1632
    %1859 = vmatprep.subr.bf16.mxu0 %v1637
    %1860 = vmatpush1.bf16.msra.mxu0 %v1636
    %1861 = vmatprep.subr.bf16.mxu0 %v1641
    %1862 = vmatpush1.bf16.msra.mxu0 %v1640
    %1863 = vmatprep.subr.bf16.mxu0 %v1645
    %1864 = vmatpush1.bf16.msra.mxu0 %v1644
    %1865 = vmatprep.subr.bf16.mxu0 %v1649
    %1866 = vmatpush1.bf16.msra.mxu0 %v1648
    %1867 = vmatprep.subr.bf16.mxu0 %v1653
    %1868 = vmatpush1.bf16.msra.mxu0 %v1652
    %1869 = vmatprep.subr.bf16.mxu0 %v1657
    %1870 = vmatpush1.bf16.msra.mxu0 %v1656
    %1871 = vmatprep.subr.bf16.mxu0 %v1661
    %1872 = vmatpush1.bf16.msra.mxu0 %v1660
    %1873 = vmatprep.subr.bf16.mxu0 %v1665
    %1874 = vmatpush1.bf16.msra.mxu0 %v1664
    %1875 = vmatprep.subr.bf16.mxu0 %v1669
    %1876 = vmatpush1.bf16.msra.mxu0 %v1668
    %1877 = vmatprep.subr.bf16.mxu0 %v1673
    %1878 = vmatpush1.bf16.msra.mxu0 %v1672
    %1879 = vmatprep.subr.bf16.mxu0 %v1677
    %1880 = vmatpush1.bf16.msra.mxu0 %v1676
    %1881 = vmatprep.mubr.bf16.mxu0 %v1163
    %1882 = vmatmul.mubr.bf16.gmra.mrb[0].mxu0 %v1162
    %v1883 = vpop.f32.mrb[0].mxu0
    %v1884 = vadd.f32 %v1843, %v1883
    %v1885 = vpop.f32.mrb[0].mxu0
    %v1886 = vadd.f32 %v1845, %v1885
    %v1887 = vpop.f32.mrb[0].mxu0
    %v1888 = vpop.f32.mrb[0].mxu0
    %1889 = vdwg.mxu0
    %1890 = vmatprep.subr.bf16.mxu0 %v1555
    %1891 = vmatpush1.bf16.msra.mxu0 %v1554
    %1892 = vmatprep.subr.bf16.mxu0 %v1559
    %1893 = vmatpush1.bf16.msra.mxu0 %v1558
    %1894 = vmatprep.subr.bf16.mxu0 %v1563
    %1895 = vmatpush1.bf16.msra.mxu0 %v1562
    %1896 = vmatprep.subr.bf16.mxu0 %v1567
    %1897 = vmatpush1.bf16.msra.mxu0 %v1566
    %1898 = vmatprep.subr.bf16.mxu0 %v1571
    %1899 = vmatpush1.bf16.msra.mxu0 %v1570
    %1900 = vmatprep.subr.bf16.mxu0 %v1575
    %1901 = vmatpush1.bf16.msra.mxu0 %v1574
    %1902 = vmatprep.subr.bf16.mxu0 %v1579
    %1903 = vmatpush1.bf16.msra.mxu0 %v1578
    %1904 = vmatprep.subr.bf16.mxu0 %v1583
    %1905 = vmatpush1.bf16.msra.mxu0 %v1582
    %1906 = vmatprep.subr.bf16.mxu0 %v1587
    %1907 = vmatpush1.bf16.msra.mxu0 %v1586
    %1908 = vmatprep.subr.bf16.mxu0 %v1591
    %1909 = vmatpush1.bf16.msra.mxu0 %v1590
    %1910 = vmatprep.subr.bf16.mxu0 %v1595
    %1911 = vmatpush1.bf16.msra.mxu0 %v1594
    %1912 = vmatprep.subr.bf16.mxu0 %v1599
    %1913 = vmatpush1.bf16.msra.mxu0 %v1598
    %1914 = vmatprep.subr.bf16.mxu0 %v1603
    %1915 = vmatpush1.bf16.msra.mxu0 %v1602
    %1916 = vmatprep.subr.bf16.mxu0 %v1607
    %1917 = vmatpush1.bf16.msra.mxu0 %v1606
    %1918 = vmatprep.subr.bf16.mxu0 %v1611
    %1919 = vmatpush1.bf16.msra.mxu0 %v1610
    %1920 = vmatprep.subr.bf16.mxu0 %v1615
    %1921 = vmatpush1.bf16.msra.mxu0 %v1614
    %1922 = vmatprep.mubr.bf16.mxu0 %v1161
    %1923 = vmatmul.mubr.bf16.gmra.mrb[0].mxu0 %v1160
    %v1924 = vpop.f32.mrb[0].mxu0
    %v1925 = vadd.f32 %v1148, %v1924
    %v1926 = vpop.f32.mrb[0].mxu0
    %v1927 = vadd.f32 %v1150, %v1926
    %v1928 = vpop.f32.mrb[0].mxu0
    %v1929 = vpop.f32.mrb[0].mxu0
    %1930 = vdwg.mxu0
    %1931 = vmatprep.subr.bf16.mxu0 %v1619
    %1932 = vmatpush1.bf16.msra.mxu0 %v1618
    %1933 = vmatprep.subr.bf16.mxu0 %v1623
    %1934 = vmatpush1.bf16.msra.mxu0 %v1622
    %1935 = vmatprep.subr.bf16.mxu0 %v1627
    %1936 = vmatpush1.bf16.msra.mxu0 %v1626
    %1937 = vmatprep.subr.bf16.mxu0 %v1631
    %1938 = vmatpush1.bf16.msra.mxu0 %v1630
    %1939 = vmatprep.subr.bf16.mxu0 %v1635
    %1940 = vmatpush1.bf16.msra.mxu0 %v1634
    %1941 = vmatprep.subr.bf16.mxu0 %v1639
    %1942 = vmatpush1.bf16.msra.mxu0 %v1638
    %1943 = vmatprep.subr.bf16.mxu0 %v1643
    %1944 = vmatpush1.bf16.msra.mxu0 %v1642
    %1945 = vmatprep.subr.bf16.mxu0 %v1647
    %1946 = vmatpush1.bf16.msra.mxu0 %v1646
    %1947 = vmatprep.subr.bf16.mxu0 %v1651
    %1948 = vmatpush1.bf16.msra.mxu0 %v1650
    %1949 = vmatprep.subr.bf16.mxu0 %v1655
    %1950 = vmatpush1.bf16.msra.mxu0 %v1654
    %1951 = vmatprep.subr.bf16.mxu0 %v1659
    %1952 = vmatpush1.bf16.msra.mxu0 %v1658
    %1953 = vmatprep.subr.bf16.mxu0 %v1663
    %1954 = vmatpush1.bf16.msra.mxu0 %v1662
    %1955 = vmatprep.subr.bf16.mxu0 %v1667
    %1956 = vmatpush1.bf16.msra.mxu0 %v1666
    %1957 = vmatprep.subr.bf16.mxu0 %v1671
    %1958 = vmatpush1.bf16.msra.mxu0 %v1670
    %1959 = vmatprep.subr.bf16.mxu0 %v1675
    %1960 = vmatpush1.bf16.msra.mxu0 %v1674
    %1961 = vmatprep.subr.bf16.mxu0 %v1679
    %1962 = vmatpush1.bf16.msra.mxu0 %v1678
    %1963 = vmatprep.mubr.bf16.mxu0 %v1163
    %1964 = vmatmul.mubr.bf16.gmra.mrb[0].mxu0 %v1162
    %v1965 = vpop.f32.mrb[0].mxu0
    %v1966 = vadd.f32 %v1925, %v1965
    %v1967 = vpop.f32.mrb[0].mxu0
    %v1968 = vadd.f32 %v1927, %v1967
    %v1969 = vpop.f32.mrb[0].mxu0
    %v1970 = vpop.f32.mrb[0].mxu0
    %1971 = vdwg.mxu0
    %v1972 = vld [vmem:[%s3] sm:$0xf]
    %v1974 = vlaneseq
    %v1975 = vshrl.u32 %v1974, 7
    %v1976 = vsub.s32 0, %v1975
    %v1977 = vrot.slane %v1972, %v1976
    %v1978 = vlaneseq
    %v1979 = vshrl.u32 %v1978, 7
    %v1980 = vsub.s32 1, %v1979
    %v1981 = vrot.slane %v1972, %v1980
    %v1982 = vlaneseq
    %v1983 = vshrl.u32 %v1982, 7
    %v1984 = vsub.s32 2, %v1983
    %v1985 = vrot.slane %v1972, %v1984
    %v1986 = vlaneseq
    %v1987 = vshrl.u32 %v1986, 7
    %v1988 = vsub.s32 3, %v1987
    %v1989 = vrot.slane %v1972, %v1988
    %v1994 = vadd.f32 %v1884, %v1977
    %v1995 = vadd.f32 %v1886, %v1981
    %v1996 = vadd.f32 %v1966, %v1985
    %v1997 = vadd.f32 %v1968, %v1989
    %v1998 = vmax.f32 %v1994, 0.0
    %v1999 = vmax.f32 %v1995, 0.0
    %v2000 = vmax.f32 %v1996, 0.0
    %v2001 = vmax.f32 %v1997, 0.0
    %v2002 = vpack.c.bf16 %v1998, %v1998
    %v2003 = vpack.c.bf16 %v1999, %v1999
    %v2004 = vpack.c.bf16 %v2000, %v2000
    %v2005 = vpack.c.bf16 %v2001, %v2001
    %v2006 = vld [vmem:[#allocation8] sm:$0xf]
    %v2007 = vld [vmem:[#allocation8 + $0x4] sm:$0xf]
    %v2008 = vld [vmem:[#allocation8 + $0x8] sm:$0xf]
    %v2009 = vld [vmem:[#allocation8 + $0xc] sm:$0xf]
    %v2010 = vld [vmem:[#allocation8 + $0x10] sm:$0xf]
    %v2011 = vld [vmem:[#allocation8 + $0x14] sm:$0xf]
    %v2012 = vld [vmem:[#allocation8 + $0x18] sm:$0xf]
    %v2013 = vld [vmem:[#allocation8 + $0x1c] sm:$0xf]
    %v2014 = vld [vmem:[#allocation8 + $0x20] sm:$0xf]
    %v2015 = vld [vmem:[#allocation8 + $0x24] sm:$0xf]
    %v2016 = vld [vmem:[#allocation8 + $0x28] sm:$0xf]
    %v2017 = vld [vmem:[#allocation8 + $0x2c] sm:$0xf]
    %v2018 = vld [vmem:[#allocation8 + $0x30] sm:$0xf]
    %v2019 = vld [vmem:[#allocation8 + $0x34] sm:$0xf]
    %v2020 = vld [vmem:[#allocation8 + $0x38] sm:$0xf]
    %v2021 = vld [vmem:[#allocation8 + $0x3c] sm:$0xf]
    %v2022 = vld [vmem:[#allocation8 + $0x40] sm:$0xf]
    %v2023 = vld [vmem:[#allocation8 + $0x44] sm:$0xf]
    %v2024 = vld [vmem:[#allocation8 + $0x48] sm:$0xf]
    %v2025 = vld [vmem:[#allocation8 + $0x4c] sm:$0xf]
    %v2026 = vld [vmem:[#allocation8 + $0x50] sm:$0xf]
    %v2027 = vld [vmem:[#allocation8 + $0x54] sm:$0xf]
    %v2028 = vld [vmem:[#allocation8 + $0x58] sm:$0xf]
    %v2029 = vld [vmem:[#allocation8 + $0x5c] sm:$0xf]
    %v2030 = vld [vmem:[#allocation8 + $0x60] sm:$0xf]
    %v2031 = vld [vmem:[#allocation8 + $0x64] sm:$0xf]
    %v2032 = vld [vmem:[#allocation8 + $0x68] sm:$0xf]
    %v2033 = vld [vmem:[#allocation8 + $0x6c] sm:$0xf]
    %v2034 = vld [vmem:[#allocation8 + $0x70] sm:$0xf]
    %v2035 = vld [vmem:[#allocation8 + $0x74] sm:$0xf]
    %v2036 = vld [vmem:[#allocation8 + $0x78] sm:$0xf]
    %v2037 = vld [vmem:[#allocation8 + $0x7c] sm:$0xf]
    %v2038 = vld [vmem:[#allocation8 + $0x80] sm:$0xf]
    %v2039 = vld [vmem:[#allocation8 + $0x84] sm:$0xf]
    %v2040 = vld [vmem:[#allocation8 + $0x88] sm:$0xf]
    %v2041 = vld [vmem:[#allocation8 + $0x8c] sm:$0xf]
    %v2042 = vld [vmem:[#allocation8 + $0x90] sm:$0xf]
    %v2043 = vld [vmem:[#allocation8 + $0x94] sm:$0xf]
    %v2044 = vld [vmem:[#allocation8 + $0x98] sm:$0xf]
    %v2045 = vld [vmem:[#allocation8 + $0x9c] sm:$0xf]
    %v2046 = vld [vmem:[#allocation8 + $0xa0] sm:$0xf]
    %v2047 = vld [vmem:[#allocation8 + $0xa4] sm:$0xf]
    %v2048 = vld [vmem:[#allocation8 + $0xa8] sm:$0xf]
    %v2049 = vld [vmem:[#allocation8 + $0xac] sm:$0xf]
    %v2050 = vld [vmem:[#allocation8 + $0xb0] sm:$0xf]
    %v2051 = vld [vmem:[#allocation8 + $0xb4] sm:$0xf]
    %v2052 = vld [vmem:[#allocation8 + $0xb8] sm:$0xf]
    %v2053 = vld [vmem:[#allocation8 + $0xbc] sm:$0xf]
    %v2054 = vld [vmem:[#allocation8 + $0xc0] sm:$0xf]
    %v2055 = vld [vmem:[#allocation8 + $0xc4] sm:$0xf]
    %v2056 = vld [vmem:[#allocation8 + $0xc8] sm:$0xf]
    %v2057 = vld [vmem:[#allocation8 + $0xcc] sm:$0xf]
    %v2058 = vld [vmem:[#allocation8 + $0xd0] sm:$0xf]
    %v2059 = vld [vmem:[#allocation8 + $0xd4] sm:$0xf]
    %v2060 = vld [vmem:[#allocation8 + $0xd8] sm:$0xf]
    %v2061 = vld [vmem:[#allocation8 + $0xdc] sm:$0xf]
    %v2062 = vld [vmem:[#allocation8 + $0xe0] sm:$0xf]
    %v2063 = vld [vmem:[#allocation8 + $0xe4] sm:$0xf]
    %v2064 = vld [vmem:[#allocation8 + $0xe8] sm:$0xf]
    %v2065 = vld [vmem:[#allocation8 + $0xec] sm:$0xf]
    %v2066 = vld [vmem:[#allocation8 + $0xf0] sm:$0xf]
    %v2067 = vld [vmem:[#allocation8 + $0xf4] sm:$0xf]
    %v2068 = vld [vmem:[#allocation8 + $0xf8] sm:$0xf]
    %v2069 = vld [vmem:[#allocation8 + $0xfc] sm:$0xf]
    %v2070 = vld [vmem:[%s5] sm:$0x1]
    %v2072 = vlaneseq
    %v2073 = vshrl.u32 %v2072, 7
    %v2074 = vsub.s32 0, %v2073
    %v2075 = vrot.slane %v2070, %v2074
    %v2141 = vunpack.c.l.b16 %v2006
    %v2142 = vunpack.c.l.b16 %v2007
    %v2143 = vunpack.c.l.b16 %v2008
    %v2144 = vunpack.c.l.b16 %v2009
    %v2145 = vunpack.c.l.b16 %v2010
    %v2146 = vunpack.c.l.b16 %v2011
    %v2147 = vunpack.c.l.b16 %v2012
    %v2148 = vunpack.c.l.b16 %v2013
    %v2149 = vunpack.c.l.b16 %v2014
    %v2150 = vunpack.c.l.b16 %v2015
    %v2151 = vunpack.c.l.b16 %v2016
    %v2152 = vunpack.c.l.b16 %v2017
    %v2153 = vunpack.c.l.b16 %v2018
    %v2154 = vunpack.c.l.b16 %v2019
    %v2155 = vunpack.c.l.b16 %v2020
    %v2156 = vunpack.c.l.b16 %v2021
    %v2157 = vunpack.c.l.b16 %v2022
    %v2158 = vunpack.c.l.b16 %v2023
    %v2159 = vunpack.c.l.b16 %v2024
    %v2160 = vunpack.c.l.b16 %v2025
    %v2161 = vunpack.c.l.b16 %v2026
    %v2162 = vunpack.c.l.b16 %v2027
    %v2163 = vunpack.c.l.b16 %v2028
    %v2164 = vunpack.c.l.b16 %v2029
    %v2165 = vunpack.c.l.b16 %v2030
    %v2166 = vunpack.c.l.b16 %v2031
    %v2167 = vunpack.c.l.b16 %v2032
    %v2168 = vunpack.c.l.b16 %v2033
    %v2169 = vunpack.c.l.b16 %v2034
    %v2170 = vunpack.c.l.b16 %v2035
    %v2171 = vunpack.c.l.b16 %v2036
    %v2172 = vunpack.c.l.b16 %v2037
    %v2173 = vunpack.c.l.b16 %v2038
    %v2174 = vunpack.c.l.b16 %v2039
    %v2175 = vunpack.c.l.b16 %v2040
    %v2176 = vunpack.c.l.b16 %v2041
    %v2177 = vunpack.c.l.b16 %v2042
    %v2178 = vunpack.c.l.b16 %v2043
    %v2179 = vunpack.c.l.b16 %v2044
    %v2180 = vunpack.c.l.b16 %v2045
    %v2181 = vunpack.c.l.b16 %v2046
    %v2182 = vunpack.c.l.b16 %v2047
    %v2183 = vunpack.c.l.b16 %v2048
    %v2184 = vunpack.c.l.b16 %v2049
    %v2185 = vunpack.c.l.b16 %v2050
    %v2186 = vunpack.c.l.b16 %v2051
    %v2187 = vunpack.c.l.b16 %v2052
    %v2188 = vunpack.c.l.b16 %v2053
    %v2189 = vunpack.c.l.b16 %v2054
    %v2190 = vunpack.c.l.b16 %v2055
    %v2191 = vunpack.c.l.b16 %v2056
    %v2192 = vunpack.c.l.b16 %v2057
    %v2193 = vunpack.c.l.b16 %v2058
    %v2194 = vunpack.c.l.b16 %v2059
    %v2195 = vunpack.c.l.b16 %v2060
    %v2196 = vunpack.c.l.b16 %v2061
    %v2197 = vunpack.c.l.b16 %v2062
    %v2198 = vunpack.c.l.b16 %v2063
    %v2199 = vunpack.c.l.b16 %v2064
    %v2200 = vunpack.c.l.b16 %v2065
    %v2201 = vunpack.c.l.b16 %v2066
    %v2202 = vunpack.c.l.b16 %v2067
    %v2203 = vunpack.c.l.b16 %v2068
    %v2204 = vunpack.c.l.b16 %v2069
    %v2205 = vpack.c.b16 %v2142, %v2141
    %v2206 = vpack.c.b16 %v2144, %v2143
    %v2207 = vpack.c.b16 %v2146, %v2145
    %v2208 = vpack.c.b16 %v2148, %v2147
    %v2209 = vpack.c.b16 %v2150, %v2149
    %v2210 = vpack.c.b16 %v2152, %v2151
    %v2211 = vpack.c.b16 %v2154, %v2153
    %v2212 = vpack.c.b16 %v2156, %v2155
    %v2213 = vpack.c.b16 %v2158, %v2157
    %v2214 = vpack.c.b16 %v2160, %v2159
    %v2215 = vpack.c.b16 %v2162, %v2161
    %v2216 = vpack.c.b16 %v2164, %v2163
    %v2217 = vpack.c.b16 %v2166, %v2165
    %v2218 = vpack.c.b16 %v2168, %v2167
    %v2219 = vpack.c.b16 %v2170, %v2169
    %v2220 = vpack.c.b16 %v2172, %v2171
    %v2221 = vpack.c.b16 %v2174, %v2173
    %v2222 = vpack.c.b16 %v2176, %v2175
    %v2223 = vpack.c.b16 %v2178, %v2177
    %v2224 = vpack.c.b16 %v2180, %v2179
    %v2225 = vpack.c.b16 %v2182, %v2181
    %v2226 = vpack.c.b16 %v2184, %v2183
    %v2227 = vpack.c.b16 %v2186, %v2185
    %v2228 = vpack.c.b16 %v2188, %v2187
    %v2229 = vpack.c.b16 %v2190, %v2189
    %v2230 = vpack.c.b16 %v2192, %v2191
    %v2231 = vpack.c.b16 %v2194, %v2193
    %v2232 = vpack.c.b16 %v2196, %v2195
    %v2233 = vpack.c.b16 %v2198, %v2197
    %v2234 = vpack.c.b16 %v2200, %v2199
    %v2235 = vpack.c.b16 %v2202, %v2201
    %v2236 = vpack.c.b16 %v2204, %v2203
    %2269 = vmatprep.subr.bf16.mxu0 0
    %2270 = vmatpush1.bf16.msra.mxu0 %v2205
    %2271 = vmatprep.subr.bf16.mxu0 0
    %2272 = vmatpush1.bf16.msra.mxu0 %v2206
    %2273 = vmatprep.subr.bf16.mxu0 0
    %2274 = vmatpush1.bf16.msra.mxu0 %v2207
    %2275 = vmatprep.subr.bf16.mxu0 0
    %2276 = vmatpush1.bf16.msra.mxu0 %v2208
    %2277 = vmatprep.subr.bf16.mxu0 0
    %2278 = vmatpush1.bf16.msra.mxu0 %v2209
    %2279 = vmatprep.subr.bf16.mxu0 0
    %2280 = vmatpush1.bf16.msra.mxu0 %v2210
    %2281 = vmatprep.subr.bf16.mxu0 0
    %2282 = vmatpush1.bf16.msra.mxu0 %v2211
    %2283 = vmatprep.subr.bf16.mxu0 0
    %2284 = vmatpush1.bf16.msra.mxu0 %v2212
    %2285 = vmatprep.subr.bf16.mxu0 0
    %2286 = vmatpush1.bf16.msra.mxu0 %v2213
    %2287 = vmatprep.subr.bf16.mxu0 0
    %2288 = vmatpush1.bf16.msra.mxu0 %v2214
    %2289 = vmatprep.subr.bf16.mxu0 0
    %2290 = vmatpush1.bf16.msra.mxu0 %v2215
    %2291 = vmatprep.subr.bf16.mxu0 0
    %2292 = vmatpush1.bf16.msra.mxu0 %v2216
    %2293 = vmatprep.subr.bf16.mxu0 0
    %2294 = vmatpush1.bf16.msra.mxu0 %v2217
    %2295 = vmatprep.subr.bf16.mxu0 0
    %2296 = vmatpush1.bf16.msra.mxu0 %v2218
    %2297 = vmatprep.subr.bf16.mxu0 0
    %2298 = vmatpush1.bf16.msra.mxu0 %v2219
    %2299 = vmatprep.subr.bf16.mxu0 0
    %2300 = vmatpush1.bf16.msra.mxu0 %v2220
    %2301 = vmatprep.mubr.bf16.mxu0 %v2003
    %2302 = vmatmul.mubr.bf16.gmra.mrb[0].mxu0 %v2002
    %v2303 = vpop.f32.mrb[0].mxu0
    %v2304 = vadd.f32 %v2075, %v2303
    %v2305 = vpop.f32.mrb[0].mxu0
    %v2306 = vpop.f32.mrb[0].mxu0
    %v2307 = vpop.f32.mrb[0].mxu0
    %2308 = vdwg.mxu0
    %2309 = vmatprep.subr.bf16.mxu0 0
    %2310 = vmatpush1.bf16.msra.mxu0 %v2221
    %2311 = vmatprep.subr.bf16.mxu0 0
    %2312 = vmatpush1.bf16.msra.mxu0 %v2222
    %2313 = vmatprep.subr.bf16.mxu0 0
    %2314 = vmatpush1.bf16.msra.mxu0 %v2223
    %2315 = vmatprep.subr.bf16.mxu0 0
    %2316 = vmatpush1.bf16.msra.mxu0 %v2224
    %2317 = vmatprep.subr.bf16.mxu0 0
    %2318 = vmatpush1.bf16.msra.mxu0 %v2225
    %2319 = vmatprep.subr.bf16.mxu0 0
    %2320 = vmatpush1.bf16.msra.mxu0 %v2226
    %2321 = vmatprep.subr.bf16.mxu0 0
    %2322 = vmatpush1.bf16.msra.mxu0 %v2227
    %2323 = vmatprep.subr.bf16.mxu0 0
    %2324 = vmatpush1.bf16.msra.mxu0 %v2228
    %2325 = vmatprep.subr.bf16.mxu0 0
    %2326 = vmatpush1.bf16.msra.mxu0 %v2229
    %2327 = vmatprep.subr.bf16.mxu0 0
    %2328 = vmatpush1.bf16.msra.mxu0 %v2230
    %2329 = vmatprep.subr.bf16.mxu0 0
    %2330 = vmatpush1.bf16.msra.mxu0 %v2231
    %2331 = vmatprep.subr.bf16.mxu0 0
    %2332 = vmatpush1.bf16.msra.mxu0 %v2232
    %2333 = vmatprep.subr.bf16.mxu0 0
    %2334 = vmatpush1.bf16.msra.mxu0 %v2233
    %2335 = vmatprep.subr.bf16.mxu0 0
    %2336 = vmatpush1.bf16.msra.mxu0 %v2234
    %2337 = vmatprep.subr.bf16.mxu0 0
    %2338 = vmatpush1.bf16.msra.mxu0 %v2235
    %2339 = vmatprep.subr.bf16.mxu0 0
    %2340 = vmatpush1.bf16.msra.mxu0 %v2236
    %2341 = vmatprep.mubr.bf16.mxu0 %v2005
    %2342 = vmatmul.mubr.bf16.gmra.mrb[0].mxu0 %v2004
    %v2343 = vpop.f32.mrb[0].mxu0
    %v2344 = vadd.f32 %v2304, %v2343
    %v2345 = vpop.f32.mrb[0].mxu0
    %v2346 = vpop.f32.mrb[0].mxu0
    %v2347 = vpop.f32.mrb[0].mxu0
    %2348 = vdwg.mxu0
    %2349 = vst [vmem:[#allocation10] sm:$0xff] %v2344
    // Predicated region
    $region42: #{tpu_custom_call.1} parent=1 // pred_check
      _
    $region43: #{tpu_custom_call.1} parent=1 // pred_check_branch
      %2351 = sbr.rel (0) target = $region45
    $region44: #{tpu_custom_call.1} parent=1 // pred_region
      %s2353 = ssub.s32 128, 128
      %2354 = vsyncadd [#allocation4], %s2353
      %s2356 = sshll.u32 [#allocation10], 4
      %s2357 = int_to_ptr.vmem [resolvable:$true] %s2356
      %2359 = dma.vmem_to_hbm [thread:$0]  %s2357, 128, %s6, [#allocation4]
    $region45: #{tpu_custom_call.1} parent=1 // pred_fallthru
      _
    // Predicated region
    $region46: #{tpu_custom_call.1} parent=1 // pred_check
      _
    $region47: #{tpu_custom_call.1} parent=1 // pred_check_branch
      %2361 = sbr.rel (0) target = $region49
    $region48: #{tpu_custom_call.1} parent=1 // pred_region
      %2362 = dma.done [#allocation4], 128
    $region49: #{tpu_custom_call.1} parent=1 // pred_fallthru
      _
    %2363 = vsyncpa [#allocation3], 1
    %2364 = vsyncpa [#allocation6], 1
    %2365 = vsyncpa [#allocation9], 1
    %2366 = vsyncpa [#allocation4], 1

</llo_original>
